<compile_context>
chip_gen: v7x
topology: tpu7x:2x2x1
jax: 0.10.0
libtpu: 0.0.40
codegen_flags: <defaults>
</compile_context>

<pallas_src>
import math

import jax
import jax.numpy as jnp
from jax.experimental import pallas as pl
from jax.experimental.pallas import tpu as pltpu


def _round_up(x: int, m: int) -> int:
    return (x + m - 1) // m * m


def _pick_chunking(tn: int) -> tuple[int, int]:
    """Split TN rows into as many sub-chunks as possible (<= 8) such that the
    chunk size stays a multiple of 8 (sublane-aligned slices)."""
    for nchunks in (8, 4, 2):
        if tn % nchunks == 0 and (tn // nchunks) % 8 == 0:
            return nchunks, tn // nchunks
    return 1, tn


def _make_kernel(tn: int, nchunks: int, chunk: int, compute_dtype):
    unroll = 8 if chunk % 8 == 0 else 1   # chunk is a multiple of 8 by construction
    waves = chunk // unroll

    def kernel(idx_ref, w_hbm, wet_ref, out_ref, emb_buf, sem):
        # idx_ref : (Np,) int32 SMEM (scalar prefetch) — clamped token indices
        # w_hbm   : (V, E) f32 HBM (memory_space=pl.ANY) — embedding table
        # wet_ref : (E, Hp) VMEM (compute dtype) — pre-transposed projection
        # out_ref : (TN, Hp) f32 VMEM — output tile for this grid step
        # emb_buf : (TN, E) f32 VMEM scratch — gathered embedding rows
        # sem     : (NCHUNKS,) DMA semaphores — one per sub-chunk
        t = pl.program_id(0)
        base = t * tn

        def issue_chunk(c):
            # Start `chunk` independent row-gather DMAs (HBM -> VMEM), all
            # signalling sem[c], in unrolled waves of 8 descriptor builds.
            @pl.loop(0, waves)
            def _issue(jb):
                for u in range(unroll):              # static partial unroll
                    k = c * chunk + jb * unroll + u
                    row = idx_ref[base + k]
                    pltpu.make_async_copy(
                        w_hbm.at[pl.ds(row, 1), :],
                        emb_buf.at[pl.ds(k, 1), :],
                        sem.at[c],
                    ).start()

        def drain_chunk(c):
            # Retire `chunk` row transfers from sem[c].  Every copy signalling
            # sem[c] has the identical (1, E) byte size, so each dummy wait
            # retires exactly one of them (completion order irrelevant).
            # TODO(synk): once byte-counting DMA-semaphore waits are validated
            # on hardware, replace with a single (chunk, E)-sized wait per
            # chunk to cut drain descriptors chunk-fold.
            @pl.loop(0, waves)
            def _drain(jb):
                for _ in range(unroll):              # static partial unroll
                    pltpu.make_async_copy(
                        w_hbm.at[pl.ds(0, 1), :],
                        emb_buf.at[pl.ds(0, 1), :],
                        sem.at[c],
                    ).wait()

        def project_chunk(c):
            lo = c * chunk                           # static -> aligned slices
            emb = emb_buf[pl.ds(lo, chunk), :].astype(compute_dtype)
            out_ref[pl.ds(lo, chunk), :] = jnp.dot(
                emb, wet_ref[...], preferred_element_type=jnp.float32
            ).astype(out_ref.dtype)

        # Intra-step software pipeline: while chunk c is multiplied on the
        # MXU, chunk c+1's row gathers are already in flight.  No cross-step
        # carry, so the grid axis stays "parallel".
        issue_chunk(0)
        for c in range(nchunks):                     # static python loop, <= 8
            if c + 1 < nchunks:
                issue_chunk(c + 1)
            drain_chunk(c)
            project_chunk(c)

    return kernel


def factorized_embedding(x, W, We, *, token_tile: int = 512,
                         compute_dtype=jnp.bfloat16):
    """x: int (B, S); W: (V, E); We: (H, E) -> (B, S, H) float32."""
    B, S = x.shape
    V, E = W.shape
    H, E2 = We.shape
    assert E2 == E
    N = B * S

    # Pad only H to a lane multiple (lane-dense unmasked output stores);
    # E stays native so each row DMA moves exactly E elements.
    Hp = _round_up(H, 128)

    # Token tile: multiple of 8, big enough to amortize the ~0.35us per-step
    # overhead, but capped so there are >= 2 grid tiles whenever possible
    # (keeps both v7x TensorCores busy under dimension_semantics="parallel").
    TN = max(8, min(_round_up(token_tile, 8), _round_up(pl.cdiv(N, 2), 8)))
    Np = _round_up(N, TN)
    num_tiles = Np // TN
    NCHUNKS, CHUNK = _pick_chunking(TN)

    # Clamp indices so the row-gather DMAs can never read out of bounds
    # (PyTorch raises on OOB instead); pad tail tokens with index 0 — their
    # output rows are sliced off below.
    idx = jnp.clip(x.reshape(-1), 0, V - 1).astype(jnp.int32)
    if Np != N:
        idx = jnp.pad(idx, (0, Np - N))
    # TODO(synk): for very large B*S (>~64K tokens) stream the index vector
    # per tile through a (TN,) SMEM-blocked input instead of scalar-prefetching
    # the whole thing (1D SMEM arrays pad to next_pow2(4*Np) bytes).

    # Embedding table stays f32 in HBM, gathered row-by-row at native width E.
    # TODO(synk): storing W as bf16 would halve gather bytes, but single-row
    # bf16 DMAs hit the packed-sublane VMEM layout and need the
    # pack-2xbf16-into-u32 bitcast trick; left out for robustness.
    Wf = W.astype(jnp.float32)

    # Pre-transpose the projection once: F.linear(emb, We) == emb @ We.T.
    # Zero-padding H -> Hp keeps the pad output columns exactly zero.
    WeT = We.astype(jnp.float32).T                   # (E, H)
    if Hp != H:
        WeT = jnp.pad(WeT, ((0, 0), (0, Hp - H)))
    WeT = WeT.astype(compute_dtype)

    kernel = _make_kernel(TN, NCHUNKS, CHUNK, compute_dtype)

    out = pl.pallas_call(
        kernel,
        out_shape=jax.ShapeDtypeStruct((Np, Hp), jnp.float32),
        grid_spec=pltpu.PrefetchScalarGridSpec(
            num_scalar_prefetch=1,
            grid=(num_tiles,),
            in_specs=[
                # W stays in HBM; rows are DMA-gathered on demand.
                pl.BlockSpec(memory_space=pl.ANY),
                # WeT is small and VMEM-resident (constant block index).
                # TODO(synk): pipeline_mode=pl.Buffered(1) would drop its
                # pointless second pipeline buffer.
                pl.BlockSpec((E, Hp), lambda t, _idx: (0, 0)),
            ],
            out_specs=pl.BlockSpec((TN, Hp), lambda t, _idx: (t, 0)),
            scratch_shapes=[
                pltpu.VMEM((TN, E), jnp.float32),
                pltpu.SemaphoreType.DMA((NCHUNKS,)),
            ],
        ),
        compiler_params=pltpu.CompilerParams(
            dimension_semantics=("parallel",),
        ),
    )(idx, Wf, WeT)

    # TODO(synk): add a VMEM-resident-W fast path (regular VMEM input with a
    # constant index_map + in-VMEM row gather, no per-row DMA descriptors)
    # gated on pltpu.get_tpu_info().vmem_capacity_bytes, with a lower resident
    # threshold on v7x (64 MiB/TC) than on v5e/v6e (128 MiB).

    # Both slices are no-ops when TN divides N and H % 128 == 0.
    return out[:N, :H].reshape(B, S, H)


if __name__ == "__main__":
    # Module hyperparameters (small, consistent with the forward pass).
    vocab_size = 128
    embedding_size = 32
    hidden_size = 64
    batch, seq = 2, 13          # N = 26 -> exercises the padded ragged tail

    key = jax.random.PRNGKey(0)
    k_w, k_we, k_x = jax.random.split(key, 3)

    # Deterministic init matching reset_parameters(): uniform(-stdv, stdv),
    # stdv = 1 / sqrt(embedding_size).
    stdv = 1.0 / math.sqrt(embedding_size)
    W = jax.random.uniform(k_w, (vocab_size, embedding_size),
                           dtype=jnp.float32, minval=-stdv, maxval=stdv)
    We = jax.random.uniform(k_we, (hidden_size, embedding_size),
                            dtype=jnp.float32, minval=-stdv, maxval=stdv)
    x = jax.random.randint(k_x, (batch, seq), 0, vocab_size, dtype=jnp.int32)

    # Pure-JAX reference.
    ref = jnp.einsum("bse,he->bsh", W[x], We)

    # Default bf16 MXU path: TN=16 -> 2 grid tiles x 2 sub-chunks of 8
    # (exercises the intra-step DMA/matmul pipeline and the 'parallel' grid).
    out_bf16 = jax.block_until_ready(
        factorized_embedding(x, W, We, token_tile=16))
    assert out_bf16.shape == (batch, seq, hidden_size)
    assert jnp.allclose(out_bf16, ref, atol=2e-2, rtol=2e-2), "bf16 path mismatch"

    # f32 path with a smaller tile: TN=8 -> 4 grid tiles, single chunk each;
    # tight tolerance against the f32 reference.
    out_f32 = jax.block_until_ready(
        factorized_embedding(x, W, We, token_tile=8,
                             compute_dtype=jnp.float32))
    assert jnp.allclose(out_f32, ref, atol=1e-5, rtol=1e-5), "f32 path mismatch"

    print("KERNEL_OK")
</pallas_src>

<mosaic_0001>
module attributes {stable_mosaic.version = 11 : i64} {
  func.func @kernel(%arg0: i32, %arg1: memref<32xi32, #tpu.memory_space<smem>>, %arg2: memref<128x32xf32, #tpu.memory_space<any>>, %arg3: memref<32x128xbf16, #tpu.memory_space<vmem>>, %arg4: memref<16x128xf32, #tpu.memory_space<vmem>>, %arg5: memref<16x32xf32, #tpu.memory_space<vmem>>, %arg6: memref<2x!tpu.dma_semaphore, #tpu.memory_space<semaphore_mem>>) attributes {dimension_semantics = [#tpu.dimension_semantics<parallel>], iteration_bounds = array<i64: 2>, scalar_prefetch = 1 : i64, scratch_operands = 2 : i64, tpu.core_type = #tpu.core_type<tc>, window_params = [{}, {pipeline_mode = #tpu.pipeline_mode<synchronous>, transform_indices = @transform_1, window_bounds = array<i64: 32, 128>}, {transform_indices = @transform_2, window_bounds = array<i64: 16, 128>}]} {
    %c16_i32 = arith.constant 16 : i32
    %0 = arith.muli %arg0, %c16_i32 : i32
    %c0_i32 = arith.constant 0 : i32
    %c1_i32 = arith.constant 1 : i32
    %1 = arith.muli %c0_i32, %c1_i32 : i32
    %c0_i32_0 = arith.constant 0 : i32
    %2 = arith.addi %c0_i32_0, %1 : i32
    %c8_i32 = arith.constant 8 : i32
    %3 = arith.muli %2, %c8_i32 : i32
    %c0_i32_1 = arith.constant 0 : i32
    %4 = arith.addi %c0_i32_1, %3 : i32
    %c0_i32_2 = arith.constant 0 : i32
    %5 = arith.addi %4, %c0_i32_2 : i32
    %6 = arith.addi %0, %5 : i32
    %7 = arith.index_cast %6 : i32 to index
    %8 = memref.load %arg1[%7] : memref<32xi32, #tpu.memory_space<smem>>
    %c0_i32_3 = arith.constant 0 : i32
    %c0_i32_4 = arith.constant 0 : i32
    %9 = tpu.memref_slice %arg2[%8, %c0_i32_4] : memref<128x32xf32, #tpu.memory_space<any>> -> memref<1x32xf32, #tpu.memory_space<any>>
    %c0_i32_5 = arith.constant 0 : i32
    %10 = tpu.memref_slice %arg5[%5, %c0_i32_5] : memref<16x32xf32, #tpu.memory_space<vmem>> -> memref<1x32xf32, #tpu.memory_space<vmem>>
    %11 = tpu.memref_slice %arg6[%c0_i32_3] : memref<2x!tpu.dma_semaphore, #tpu.memory_space<semaphore_mem>> -> memref<1x!tpu.dma_semaphore, #tpu.memory_space<semaphore_mem>>
    %12 = tpu.memref_squeeze %11 : memref<1x!tpu.dma_semaphore, #tpu.memory_space<semaphore_mem>> -> memref<!tpu.dma_semaphore, #tpu.memory_space<semaphore_mem>>
    tpu.enqueue_dma source(%9 : memref<1x32xf32, #tpu.memory_space<any>>) target(%10 : memref<1x32xf32, #tpu.memory_space<vmem>>) target_semaphore(%12 : memref<!tpu.dma_semaphore, #tpu.memory_space<semaphore_mem>>)
    %c8_i32_6 = arith.constant 8 : i32
    %13 = arith.muli %2, %c8_i32_6 : i32
    %c0_i32_7 = arith.constant 0 : i32
    %14 = arith.addi %c0_i32_7, %13 : i32
    %c1_i32_8 = arith.constant 1 : i32
    %15 = arith.addi %14, %c1_i32_8 : i32
    %16 = arith.addi %0, %15 : i32
    %17 = arith.index_cast %16 : i32 to index
    %18 = memref.load %arg1[%17] : memref<32xi32, #tpu.memory_space<smem>>
    %c0_i32_9 = arith.constant 0 : i32
    %c0_i32_10 = arith.constant 0 : i32
    %19 = tpu.memref_slice %arg2[%18, %c0_i32_10] : memref<128x32xf32, #tpu.memory_space<any>> -> memref<1x32xf32, #tpu.memory_space<any>>
    %c0_i32_11 = arith.constant 0 : i32
    %20 = tpu.memref_slice %arg5[%15, %c0_i32_11] : memref<16x32xf32, #tpu.memory_space<vmem>> -> memref<1x32xf32, #tpu.memory_space<vmem>>
    %21 = tpu.memref_slice %arg6[%c0_i32_9] : memref<2x!tpu.dma_semaphore, #tpu.memory_space<semaphore_mem>> -> memref<1x!tpu.dma_semaphore, #tpu.memory_space<semaphore_mem>>
    %22 = tpu.memref_squeeze %21 : memref<1x!tpu.dma_semaphore, #tpu.memory_space<semaphore_mem>> -> memref<!tpu.dma_semaphore, #tpu.memory_space<semaphore_mem>>
    tpu.enqueue_dma source(%19 : memref<1x32xf32, #tpu.memory_space<any>>) target(%20 : memref<1x32xf32, #tpu.memory_space<vmem>>) target_semaphore(%22 : memref<!tpu.dma_semaphore, #tpu.memory_space<semaphore_mem>>)
    %c8_i32_12 = arith.constant 8 : i32
    %23 = arith.muli %2, %c8_i32_12 : i32
    %c0_i32_13 = arith.constant 0 : i32
    %24 = arith.addi %c0_i32_13, %23 : i32
    %c2_i32 = arith.constant 2 : i32
    %25 = arith.addi %24, %c2_i32 : i32
    %26 = arith.addi %0, %25 : i32
    %27 = arith.index_cast %26 : i32 to index
    %28 = memref.load %arg1[%27] : memref<32xi32, #tpu.memory_space<smem>>
    %c0_i32_14 = arith.constant 0 : i32
    %c0_i32_15 = arith.constant 0 : i32
    %29 = tpu.memref_slice %arg2[%28, %c0_i32_15] : memref<128x32xf32, #tpu.memory_space<any>> -> memref<1x32xf32, #tpu.memory_space<any>>
    %c0_i32_16 = arith.constant 0 : i32
    %30 = tpu.memref_slice %arg5[%25, %c0_i32_16] : memref<16x32xf32, #tpu.memory_space<vmem>> -> memref<1x32xf32, #tpu.memory_space<vmem>>
    %31 = tpu.memref_slice %arg6[%c0_i32_14] : memref<2x!tpu.dma_semaphore, #tpu.memory_space<semaphore_mem>> -> memref<1x!tpu.dma_semaphore, #tpu.memory_space<semaphore_mem>>
    %32 = tpu.memref_squeeze %31 : memref<1x!tpu.dma_semaphore, #tpu.memory_space<semaphore_mem>> -> memref<!tpu.dma_semaphore, #tpu.memory_space<semaphore_mem>>
    tpu.enqueue_dma source(%29 : memref<1x32xf32, #tpu.memory_space<any>>) target(%30 : memref<1x32xf32, #tpu.memory_space<vmem>>) target_semaphore(%32 : memref<!tpu.dma_semaphore, #tpu.memory_space<semaphore_mem>>)
    %c8_i32_17 = arith.constant 8 : i32
    %33 = arith.muli %2, %c8_i32_17 : i32
    %c0_i32_18 = arith.constant 0 : i32
    %34 = arith.addi %c0_i32_18, %33 : i32
    %c3_i32 = arith.constant 3 : i32
    %35 = arith.addi %34, %c3_i32 : i32
    %36 = arith.addi %0, %35 : i32
    %37 = arith.index_cast %36 : i32 to index
    %38 = memref.load %arg1[%37] : memref<32xi32, #tpu.memory_space<smem>>
    %c0_i32_19 = arith.constant 0 : i32
    %c0_i32_20 = arith.constant 0 : i32
    %39 = tpu.memref_slice %arg2[%38, %c0_i32_20] : memref<128x32xf32, #tpu.memory_space<any>> -> memref<1x32xf32, #tpu.memory_space<any>>
    %c0_i32_21 = arith.constant 0 : i32
    %40 = tpu.memref_slice %arg5[%35, %c0_i32_21] : memref<16x32xf32, #tpu.memory_space<vmem>> -> memref<1x32xf32, #tpu.memory_space<vmem>>
    %41 = tpu.memref_slice %arg6[%c0_i32_19] : memref<2x!tpu.dma_semaphore, #tpu.memory_space<semaphore_mem>> -> memref<1x!tpu.dma_semaphore, #tpu.memory_space<semaphore_mem>>
    %42 = tpu.memref_squeeze %41 : memref<1x!tpu.dma_semaphore, #tpu.memory_space<semaphore_mem>> -> memref<!tpu.dma_semaphore, #tpu.memory_space<semaphore_mem>>
    tpu.enqueue_dma source(%39 : memref<1x32xf32, #tpu.memory_space<any>>) target(%40 : memref<1x32xf32, #tpu.memory_space<vmem>>) target_semaphore(%42 : memref<!tpu.dma_semaphore, #tpu.memory_space<semaphore_mem>>)
    %c8_i32_22 = arith.constant 8 : i32
    %43 = arith.muli %2, %c8_i32_22 : i32
    %c0_i32_23 = arith.constant 0 : i32
    %44 = arith.addi %c0_i32_23, %43 : i32
    %c4_i32 = arith.constant 4 : i32
    %45 = arith.addi %44, %c4_i32 : i32
    %46 = arith.addi %0, %45 : i32
    %47 = arith.index_cast %46 : i32 to index
    %48 = memref.load %arg1[%47] : memref<32xi32, #tpu.memory_space<smem>>
    %c0_i32_24 = arith.constant 0 : i32
    %c0_i32_25 = arith.constant 0 : i32
    %49 = tpu.memref_slice %arg2[%48, %c0_i32_25] : memref<128x32xf32, #tpu.memory_space<any>> -> memref<1x32xf32, #tpu.memory_space<any>>
    %c0_i32_26 = arith.constant 0 : i32
    %50 = tpu.memref_slice %arg5[%45, %c0_i32_26] : memref<16x32xf32, #tpu.memory_space<vmem>> -> memref<1x32xf32, #tpu.memory_space<vmem>>
    %51 = tpu.memref_slice %arg6[%c0_i32_24] : memref<2x!tpu.dma_semaphore, #tpu.memory_space<semaphore_mem>> -> memref<1x!tpu.dma_semaphore, #tpu.memory_space<semaphore_mem>>
    %52 = tpu.memref_squeeze %51 : memref<1x!tpu.dma_semaphore, #tpu.memory_space<semaphore_mem>> -> memref<!tpu.dma_semaphore, #tpu.memory_space<semaphore_mem>>
    tpu.enqueue_dma source(%49 : memref<1x32xf32, #tpu.memory_space<any>>) target(%50 : memref<1x32xf32, #tpu.memory_space<vmem>>) target_semaphore(%52 : memref<!tpu.dma_semaphore, #tpu.memory_space<semaphore_mem>>)
    %c8_i32_27 = arith.constant 8 : i32
    %53 = arith.muli %2, %c8_i32_27 : i32
    %c0_i32_28 = arith.constant 0 : i32
    %54 = arith.addi %c0_i32_28, %53 : i32
    %c5_i32 = arith.constant 5 : i32
    %55 = arith.addi %54, %c5_i32 : i32
    %56 = arith.addi %0, %55 : i32
    %57 = arith.index_cast %56 : i32 to index
    %58 = memref.load %arg1[%57] : memref<32xi32, #tpu.memory_space<smem>>
    %c0_i32_29 = arith.constant 0 : i32
    %c0_i32_30 = arith.constant 0 : i32
    %59 = tpu.memref_slice %arg2[%58, %c0_i32_30] : memref<128x32xf32, #tpu.memory_space<any>> -> memref<1x32xf32, #tpu.memory_space<any>>
    %c0_i32_31 = arith.constant 0 : i32
    %60 = tpu.memref_slice %arg5[%55, %c0_i32_31] : memref<16x32xf32, #tpu.memory_space<vmem>> -> memref<1x32xf32, #tpu.memory_space<vmem>>
    %61 = tpu.memref_slice %arg6[%c0_i32_29] : memref<2x!tpu.dma_semaphore, #tpu.memory_space<semaphore_mem>> -> memref<1x!tpu.dma_semaphore, #tpu.memory_space<semaphore_mem>>
    %62 = tpu.memref_squeeze %61 : memref<1x!tpu.dma_semaphore, #tpu.memory_space<semaphore_mem>> -> memref<!tpu.dma_semaphore, #tpu.memory_space<semaphore_mem>>
    tpu.enqueue_dma source(%59 : memref<1x32xf32, #tpu.memory_space<any>>) target(%60 : memref<1x32xf32, #tpu.memory_space<vmem>>) target_semaphore(%62 : memref<!tpu.dma_semaphore, #tpu.memory_space<semaphore_mem>>)
    %c8_i32_32 = arith.constant 8 : i32
    %63 = arith.muli %2, %c8_i32_32 : i32
    %c0_i32_33 = arith.constant 0 : i32
    %64 = arith.addi %c0_i32_33, %63 : i32
    %c6_i32 = arith.constant 6 : i32
    %65 = arith.addi %64, %c6_i32 : i32
    %66 = arith.addi %0, %65 : i32
    %67 = arith.index_cast %66 : i32 to index
    %68 = memref.load %arg1[%67] : memref<32xi32, #tpu.memory_space<smem>>
    %c0_i32_34 = arith.constant 0 : i32
    %c0_i32_35 = arith.constant 0 : i32
    %69 = tpu.memref_slice %arg2[%68, %c0_i32_35] : memref<128x32xf32, #tpu.memory_space<any>> -> memref<1x32xf32, #tpu.memory_space<any>>
    %c0_i32_36 = arith.constant 0 : i32
    %70 = tpu.memref_slice %arg5[%65, %c0_i32_36] : memref<16x32xf32, #tpu.memory_space<vmem>> -> memref<1x32xf32, #tpu.memory_space<vmem>>
    %71 = tpu.memref_slice %arg6[%c0_i32_34] : memref<2x!tpu.dma_semaphore, #tpu.memory_space<semaphore_mem>> -> memref<1x!tpu.dma_semaphore, #tpu.memory_space<semaphore_mem>>
    %72 = tpu.memref_squeeze %71 : memref<1x!tpu.dma_semaphore, #tpu.memory_space<semaphore_mem>> -> memref<!tpu.dma_semaphore, #tpu.memory_space<semaphore_mem>>
    tpu.enqueue_dma source(%69 : memref<1x32xf32, #tpu.memory_space<any>>) target(%70 : memref<1x32xf32, #tpu.memory_space<vmem>>) target_semaphore(%72 : memref<!tpu.dma_semaphore, #tpu.memory_space<semaphore_mem>>)
    %c8_i32_37 = arith.constant 8 : i32
    %73 = arith.muli %2, %c8_i32_37 : i32
    %c0_i32_38 = arith.constant 0 : i32
    %74 = arith.addi %c0_i32_38, %73 : i32
    %c7_i32 = arith.constant 7 : i32
    %75 = arith.addi %74, %c7_i32 : i32
    %76 = arith.addi %0, %75 : i32
    %77 = arith.index_cast %76 : i32 to index
    %78 = memref.load %arg1[%77] : memref<32xi32, #tpu.memory_space<smem>>
    %c0_i32_39 = arith.constant 0 : i32
    %c0_i32_40 = arith.constant 0 : i32
    %79 = tpu.memref_slice %arg2[%78, %c0_i32_40] : memref<128x32xf32, #tpu.memory_space<any>> -> memref<1x32xf32, #tpu.memory_space<any>>
    %c0_i32_41 = arith.constant 0 : i32
    %80 = tpu.memref_slice %arg5[%75, %c0_i32_41] : memref<16x32xf32, #tpu.memory_space<vmem>> -> memref<1x32xf32, #tpu.memory_space<vmem>>
    %81 = tpu.memref_slice %arg6[%c0_i32_39] : memref<2x!tpu.dma_semaphore, #tpu.memory_space<semaphore_mem>> -> memref<1x!tpu.dma_semaphore, #tpu.memory_space<semaphore_mem>>
    %82 = tpu.memref_squeeze %81 : memref<1x!tpu.dma_semaphore, #tpu.memory_space<semaphore_mem>> -> memref<!tpu.dma_semaphore, #tpu.memory_space<semaphore_mem>>
    tpu.enqueue_dma source(%79 : memref<1x32xf32, #tpu.memory_space<any>>) target(%80 : memref<1x32xf32, #tpu.memory_space<vmem>>) target_semaphore(%82 : memref<!tpu.dma_semaphore, #tpu.memory_space<semaphore_mem>>)
    %c1_i32_42 = arith.constant 1 : i32
    %c0_i32_43 = arith.constant 0 : i32
    %c1_i32_44 = arith.constant 1 : i32
    %83 = arith.muli %c0_i32_43, %c1_i32_44 : i32
    %c0_i32_45 = arith.constant 0 : i32
    %84 = arith.addi %c0_i32_45, %83 : i32
    %c8_i32_46 = arith.constant 8 : i32
    %85 = arith.muli %84, %c8_i32_46 : i32
    %c8_i32_47 = arith.constant 8 : i32
    %86 = arith.addi %c8_i32_47, %85 : i32
    %c0_i32_48 = arith.constant 0 : i32
    %87 = arith.addi %86, %c0_i32_48 : i32
    %88 = arith.addi %0, %87 : i32
    %89 = arith.index_cast %88 : i32 to index
    %90 = memref.load %arg1[%89] : memref<32xi32, #tpu.memory_space<smem>>
    %c1_i32_49 = arith.constant 1 : i32
    %c0_i32_50 = arith.constant 0 : i32
    %91 = tpu.memref_slice %arg2[%90, %c0_i32_50] : memref<128x32xf32, #tpu.memory_space<any>> -> memref<1x32xf32, #tpu.memory_space<any>>
    %c0_i32_51 = arith.constant 0 : i32
    %92 = tpu.memref_slice %arg5[%87, %c0_i32_51] : memref<16x32xf32, #tpu.memory_space<vmem>> -> memref<1x32xf32, #tpu.memory_space<vmem>>
    %93 = tpu.memref_slice %arg6[%c1_i32_49] : memref<2x!tpu.dma_semaphore, #tpu.memory_space<semaphore_mem>> -> memref<1x!tpu.dma_semaphore, #tpu.memory_space<semaphore_mem>>
    %94 = tpu.memref_squeeze %93 : memref<1x!tpu.dma_semaphore, #tpu.memory_space<semaphore_mem>> -> memref<!tpu.dma_semaphore, #tpu.memory_space<semaphore_mem>>
    tpu.enqueue_dma source(%91 : memref<1x32xf32, #tpu.memory_space<any>>) target(%92 : memref<1x32xf32, #tpu.memory_space<vmem>>) target_semaphore(%94 : memref<!tpu.dma_semaphore, #tpu.memory_space<semaphore_mem>>)
    %c8_i32_52 = arith.constant 8 : i32
    %95 = arith.muli %84, %c8_i32_52 : i32
    %c8_i32_53 = arith.constant 8 : i32
    %96 = arith.addi %c8_i32_53, %95 : i32
    %c1_i32_54 = arith.constant 1 : i32
    %97 = arith.addi %96, %c1_i32_54 : i32
    %98 = arith.addi %0, %97 : i32
    %99 = arith.index_cast %98 : i32 to index
    %100 = memref.load %arg1[%99] : memref<32xi32, #tpu.memory_space<smem>>
    %c1_i32_55 = arith.constant 1 : i32
    %c0_i32_56 = arith.constant 0 : i32
    %101 = tpu.memref_slice %arg2[%100, %c0_i32_56] : memref<128x32xf32, #tpu.memory_space<any>> -> memref<1x32xf32, #tpu.memory_space<any>>
    %c0_i32_57 = arith.constant 0 : i32
    %102 = tpu.memref_slice %arg5[%97, %c0_i32_57] : memref<16x32xf32, #tpu.memory_space<vmem>> -> memref<1x32xf32, #tpu.memory_space<vmem>>
    %103 = tpu.memref_slice %arg6[%c1_i32_55] : memref<2x!tpu.dma_semaphore, #tpu.memory_space<semaphore_mem>> -> memref<1x!tpu.dma_semaphore, #tpu.memory_space<semaphore_mem>>
    %104 = tpu.memref_squeeze %103 : memref<1x!tpu.dma_semaphore, #tpu.memory_space<semaphore_mem>> -> memref<!tpu.dma_semaphore, #tpu.memory_space<semaphore_mem>>
    tpu.enqueue_dma source(%101 : memref<1x32xf32, #tpu.memory_space<any>>) target(%102 : memref<1x32xf32, #tpu.memory_space<vmem>>) target_semaphore(%104 : memref<!tpu.dma_semaphore, #tpu.memory_space<semaphore_mem>>)
    %c8_i32_58 = arith.constant 8 : i32
    %105 = arith.muli %84, %c8_i32_58 : i32
    %c8_i32_59 = arith.constant 8 : i32
    %106 = arith.addi %c8_i32_59, %105 : i32
    %c2_i32_60 = arith.constant 2 : i32
    %107 = arith.addi %106, %c2_i32_60 : i32
    %108 = arith.addi %0, %107 : i32
    %109 = arith.index_cast %108 : i32 to index
    %110 = memref.load %arg1[%109] : memref<32xi32, #tpu.memory_space<smem>>
    %c1_i32_61 = arith.constant 1 : i32
    %c0_i32_62 = arith.constant 0 : i32
    %111 = tpu.memref_slice %arg2[%110, %c0_i32_62] : memref<128x32xf32, #tpu.memory_space<any>> -> memref<1x32xf32, #tpu.memory_space<any>>
    %c0_i32_63 = arith.constant 0 : i32
    %112 = tpu.memref_slice %arg5[%107, %c0_i32_63] : memref<16x32xf32, #tpu.memory_space<vmem>> -> memref<1x32xf32, #tpu.memory_space<vmem>>
    %113 = tpu.memref_slice %arg6[%c1_i32_61] : memref<2x!tpu.dma_semaphore, #tpu.memory_space<semaphore_mem>> -> memref<1x!tpu.dma_semaphore, #tpu.memory_space<semaphore_mem>>
    %114 = tpu.memref_squeeze %113 : memref<1x!tpu.dma_semaphore, #tpu.memory_space<semaphore_mem>> -> memref<!tpu.dma_semaphore, #tpu.memory_space<semaphore_mem>>
    tpu.enqueue_dma source(%111 : memref<1x32xf32, #tpu.memory_space<any>>) target(%112 : memref<1x32xf32, #tpu.memory_space<vmem>>) target_semaphore(%114 : memref<!tpu.dma_semaphore, #tpu.memory_space<semaphore_mem>>)
    %c8_i32_64 = arith.constant 8 : i32
    %115 = arith.muli %84, %c8_i32_64 : i32
    %c8_i32_65 = arith.constant 8 : i32
    %116 = arith.addi %c8_i32_65, %115 : i32
    %c3_i32_66 = arith.constant 3 : i32
    %117 = arith.addi %116, %c3_i32_66 : i32
    %118 = arith.addi %0, %117 : i32
    %119 = arith.index_cast %118 : i32 to index
    %120 = memref.load %arg1[%119] : memref<32xi32, #tpu.memory_space<smem>>
    %c1_i32_67 = arith.constant 1 : i32
    %c0_i32_68 = arith.constant 0 : i32
    %121 = tpu.memref_slice %arg2[%120, %c0_i32_68] : memref<128x32xf32, #tpu.memory_space<any>> -> memref<1x32xf32, #tpu.memory_space<any>>
    %c0_i32_69 = arith.constant 0 : i32
    %122 = tpu.memref_slice %arg5[%117, %c0_i32_69] : memref<16x32xf32, #tpu.memory_space<vmem>> -> memref<1x32xf32, #tpu.memory_space<vmem>>
    %123 = tpu.memref_slice %arg6[%c1_i32_67] : memref<2x!tpu.dma_semaphore, #tpu.memory_space<semaphore_mem>> -> memref<1x!tpu.dma_semaphore, #tpu.memory_space<semaphore_mem>>
    %124 = tpu.memref_squeeze %123 : memref<1x!tpu.dma_semaphore, #tpu.memory_space<semaphore_mem>> -> memref<!tpu.dma_semaphore, #tpu.memory_space<semaphore_mem>>
    tpu.enqueue_dma source(%121 : memref<1x32xf32, #tpu.memory_space<any>>) target(%122 : memref<1x32xf32, #tpu.memory_space<vmem>>) target_semaphore(%124 : memref<!tpu.dma_semaphore, #tpu.memory_space<semaphore_mem>>)
    %c8_i32_70 = arith.constant 8 : i32
    %125 = arith.muli %84, %c8_i32_70 : i32
    %c8_i32_71 = arith.constant 8 : i32
    %126 = arith.addi %c8_i32_71, %125 : i32
    %c4_i32_72 = arith.constant 4 : i32
    %127 = arith.addi %126, %c4_i32_72 : i32
    %128 = arith.addi %0, %127 : i32
    %129 = arith.index_cast %128 : i32 to index
    %130 = memref.load %arg1[%129] : memref<32xi32, #tpu.memory_space<smem>>
    %c1_i32_73 = arith.constant 1 : i32
    %c0_i32_74 = arith.constant 0 : i32
    %131 = tpu.memref_slice %arg2[%130, %c0_i32_74] : memref<128x32xf32, #tpu.memory_space<any>> -> memref<1x32xf32, #tpu.memory_space<any>>
    %c0_i32_75 = arith.constant 0 : i32
    %132 = tpu.memref_slice %arg5[%127, %c0_i32_75] : memref<16x32xf32, #tpu.memory_space<vmem>> -> memref<1x32xf32, #tpu.memory_space<vmem>>
    %133 = tpu.memref_slice %arg6[%c1_i32_73] : memref<2x!tpu.dma_semaphore, #tpu.memory_space<semaphore_mem>> -> memref<1x!tpu.dma_semaphore, #tpu.memory_space<semaphore_mem>>
    %134 = tpu.memref_squeeze %133 : memref<1x!tpu.dma_semaphore, #tpu.memory_space<semaphore_mem>> -> memref<!tpu.dma_semaphore, #tpu.memory_space<semaphore_mem>>
    tpu.enqueue_dma source(%131 : memref<1x32xf32, #tpu.memory_space<any>>) target(%132 : memref<1x32xf32, #tpu.memory_space<vmem>>) target_semaphore(%134 : memref<!tpu.dma_semaphore, #tpu.memory_space<semaphore_mem>>)
    %c8_i32_76 = arith.constant 8 : i32
    %135 = arith.muli %84, %c8_i32_76 : i32
    %c8_i32_77 = arith.constant 8 : i32
    %136 = arith.addi %c8_i32_77, %135 : i32
    %c5_i32_78 = arith.constant 5 : i32
    %137 = arith.addi %136, %c5_i32_78 : i32
    %138 = arith.addi %0, %137 : i32
    %139 = arith.index_cast %138 : i32 to index
    %140 = memref.load %arg1[%139] : memref<32xi32, #tpu.memory_space<smem>>
    %c1_i32_79 = arith.constant 1 : i32
    %c0_i32_80 = arith.constant 0 : i32
    %141 = tpu.memref_slice %arg2[%140, %c0_i32_80] : memref<128x32xf32, #tpu.memory_space<any>> -> memref<1x32xf32, #tpu.memory_space<any>>
    %c0_i32_81 = arith.constant 0 : i32
    %142 = tpu.memref_slice %arg5[%137, %c0_i32_81] : memref<16x32xf32, #tpu.memory_space<vmem>> -> memref<1x32xf32, #tpu.memory_space<vmem>>
    %143 = tpu.memref_slice %arg6[%c1_i32_79] : memref<2x!tpu.dma_semaphore, #tpu.memory_space<semaphore_mem>> -> memref<1x!tpu.dma_semaphore, #tpu.memory_space<semaphore_mem>>
    %144 = tpu.memref_squeeze %143 : memref<1x!tpu.dma_semaphore, #tpu.memory_space<semaphore_mem>> -> memref<!tpu.dma_semaphore, #tpu.memory_space<semaphore_mem>>
    tpu.enqueue_dma source(%141 : memref<1x32xf32, #tpu.memory_space<any>>) target(%142 : memref<1x32xf32, #tpu.memory_space<vmem>>) target_semaphore(%144 : memref<!tpu.dma_semaphore, #tpu.memory_space<semaphore_mem>>)
    %c8_i32_82 = arith.constant 8 : i32
    %145 = arith.muli %84, %c8_i32_82 : i32
    %c8_i32_83 = arith.constant 8 : i32
    %146 = arith.addi %c8_i32_83, %145 : i32
    %c6_i32_84 = arith.constant 6 : i32
    %147 = arith.addi %146, %c6_i32_84 : i32
    %148 = arith.addi %0, %147 : i32
    %149 = arith.index_cast %148 : i32 to index
    %150 = memref.load %arg1[%149] : memref<32xi32, #tpu.memory_space<smem>>
    %c1_i32_85 = arith.constant 1 : i32
    %c0_i32_86 = arith.constant 0 : i32
    %151 = tpu.memref_slice %arg2[%150, %c0_i32_86] : memref<128x32xf32, #tpu.memory_space<any>> -> memref<1x32xf32, #tpu.memory_space<any>>
    %c0_i32_87 = arith.constant 0 : i32
    %152 = tpu.memref_slice %arg5[%147, %c0_i32_87] : memref<16x32xf32, #tpu.memory_space<vmem>> -> memref<1x32xf32, #tpu.memory_space<vmem>>
    %153 = tpu.memref_slice %arg6[%c1_i32_85] : memref<2x!tpu.dma_semaphore, #tpu.memory_space<semaphore_mem>> -> memref<1x!tpu.dma_semaphore, #tpu.memory_space<semaphore_mem>>
    %154 = tpu.memref_squeeze %153 : memref<1x!tpu.dma_semaphore, #tpu.memory_space<semaphore_mem>> -> memref<!tpu.dma_semaphore, #tpu.memory_space<semaphore_mem>>
    tpu.enqueue_dma source(%151 : memref<1x32xf32, #tpu.memory_space<any>>) target(%152 : memref<1x32xf32, #tpu.memory_space<vmem>>) target_semaphore(%154 : memref<!tpu.dma_semaphore, #tpu.memory_space<semaphore_mem>>)
    %c8_i32_88 = arith.constant 8 : i32
    %155 = arith.muli %84, %c8_i32_88 : i32
    %c8_i32_89 = arith.constant 8 : i32
    %156 = arith.addi %c8_i32_89, %155 : i32
    %c7_i32_90 = arith.constant 7 : i32
    %157 = arith.addi %156, %c7_i32_90 : i32
    %158 = arith.addi %0, %157 : i32
    %159 = arith.index_cast %158 : i32 to index
    %160 = memref.load %arg1[%159] : memref<32xi32, #tpu.memory_space<smem>>
    %c1_i32_91 = arith.constant 1 : i32
    %c0_i32_92 = arith.constant 0 : i32
    %161 = tpu.memref_slice %arg2[%160, %c0_i32_92] : memref<128x32xf32, #tpu.memory_space<any>> -> memref<1x32xf32, #tpu.memory_space<any>>
    %c0_i32_93 = arith.constant 0 : i32
    %162 = tpu.memref_slice %arg5[%157, %c0_i32_93] : memref<16x32xf32, #tpu.memory_space<vmem>> -> memref<1x32xf32, #tpu.memory_space<vmem>>
    %163 = tpu.memref_slice %arg6[%c1_i32_91] : memref<2x!tpu.dma_semaphore, #tpu.memory_space<semaphore_mem>> -> memref<1x!tpu.dma_semaphore, #tpu.memory_space<semaphore_mem>>
    %164 = tpu.memref_squeeze %163 : memref<1x!tpu.dma_semaphore, #tpu.memory_space<semaphore_mem>> -> memref<!tpu.dma_semaphore, #tpu.memory_space<semaphore_mem>>
    tpu.enqueue_dma source(%161 : memref<1x32xf32, #tpu.memory_space<any>>) target(%162 : memref<1x32xf32, #tpu.memory_space<vmem>>) target_semaphore(%164 : memref<!tpu.dma_semaphore, #tpu.memory_space<semaphore_mem>>)
    %c1_i32_94 = arith.constant 1 : i32
    %c0_i32_95 = arith.constant 0 : i32
    %c0_i32_96 = arith.constant 0 : i32
    %c0_i32_97 = arith.constant 0 : i32
    %c0_i32_98 = arith.constant 0 : i32
    %165 = tpu.memref_slice %arg2[%c0_i32_97, %c0_i32_98] : memref<128x32xf32, #tpu.memory_space<any>> -> memref<1x32xf32, #tpu.memory_space<any>>
    %c0_i32_99 = arith.constant 0 : i32
    %c0_i32_100 = arith.constant 0 : i32
    %166 = tpu.memref_slice %arg5[%c0_i32_99, %c0_i32_100] : memref<16x32xf32, #tpu.memory_space<vmem>> -> memref<1x32xf32, #tpu.memory_space<vmem>>
    %167 = tpu.memref_slice %arg6[%c0_i32_96] : memref<2x!tpu.dma_semaphore, #tpu.memory_space<semaphore_mem>> -> memref<1x!tpu.dma_semaphore, #tpu.memory_space<semaphore_mem>>
    %168 = tpu.memref_squeeze %167 : memref<1x!tpu.dma_semaphore, #tpu.memory_space<semaphore_mem>> -> memref<!tpu.dma_semaphore, #tpu.memory_space<semaphore_mem>>
    tpu.wait_dma2 semaphore(%168 : memref<!tpu.dma_semaphore, #tpu.memory_space<semaphore_mem>>) src(%165 : memref<1x32xf32, #tpu.memory_space<any>>) dst(%166 : memref<1x32xf32, #tpu.memory_space<vmem>>)
    %c0_i32_101 = arith.constant 0 : i32
    %c0_i32_102 = arith.constant 0 : i32
    %c0_i32_103 = arith.constant 0 : i32
    %169 = tpu.memref_slice %arg2[%c0_i32_102, %c0_i32_103] : memref<128x32xf32, #tpu.memory_space<any>> -> memref<1x32xf32, #tpu.memory_space<any>>
    %c0_i32_104 = arith.constant 0 : i32
    %c0_i32_105 = arith.constant 0 : i32
    %170 = tpu.memref_slice %arg5[%c0_i32_104, %c0_i32_105] : memref<16x32xf32, #tpu.memory_space<vmem>> -> memref<1x32xf32, #tpu.memory_space<vmem>>
    %171 = tpu.memref_slice %arg6[%c0_i32_101] : memref<2x!tpu.dma_semaphore, #tpu.memory_space<semaphore_mem>> -> memref<1x!tpu.dma_semaphore, #tpu.memory_space<semaphore_mem>>
    %172 = tpu.memref_squeeze %171 : memref<1x!tpu.dma_semaphore, #tpu.memory_space<semaphore_mem>> -> memref<!tpu.dma_semaphore, #tpu.memory_space<semaphore_mem>>
    tpu.wait_dma2 semaphore(%172 : memref<!tpu.dma_semaphore, #tpu.memory_space<semaphore_mem>>) src(%169 : memref<1x32xf32, #tpu.memory_space<any>>) dst(%170 : memref<1x32xf32, #tpu.memory_space<vmem>>)
    %c0_i32_106 = arith.constant 0 : i32
    %c0_i32_107 = arith.constant 0 : i32
    %c0_i32_108 = arith.constant 0 : i32
    %173 = tpu.memref_slice %arg2[%c0_i32_107, %c0_i32_108] : memref<128x32xf32, #tpu.memory_space<any>> -> memref<1x32xf32, #tpu.memory_space<any>>
    %c0_i32_109 = arith.constant 0 : i32
    %c0_i32_110 = arith.constant 0 : i32
    %174 = tpu.memref_slice %arg5[%c0_i32_109, %c0_i32_110] : memref<16x32xf32, #tpu.memory_space<vmem>> -> memref<1x32xf32, #tpu.memory_space<vmem>>
    %175 = tpu.memref_slice %arg6[%c0_i32_106] : memref<2x!tpu.dma_semaphore, #tpu.memory_space<semaphore_mem>> -> memref<1x!tpu.dma_semaphore, #tpu.memory_space<semaphore_mem>>
    %176 = tpu.memref_squeeze %175 : memref<1x!tpu.dma_semaphore, #tpu.memory_space<semaphore_mem>> -> memref<!tpu.dma_semaphore, #tpu.memory_space<semaphore_mem>>
    tpu.wait_dma2 semaphore(%176 : memref<!tpu.dma_semaphore, #tpu.memory_space<semaphore_mem>>) src(%173 : memref<1x32xf32, #tpu.memory_space<any>>) dst(%174 : memref<1x32xf32, #tpu.memory_space<vmem>>)
    %c0_i32_111 = arith.constant 0 : i32
    %c0_i32_112 = arith.constant 0 : i32
    %c0_i32_113 = arith.constant 0 : i32
    %177 = tpu.memref_slice %arg2[%c0_i32_112, %c0_i32_113] : memref<128x32xf32, #tpu.memory_space<any>> -> memref<1x32xf32, #tpu.memory_space<any>>
    %c0_i32_114 = arith.constant 0 : i32
    %c0_i32_115 = arith.constant 0 : i32
    %178 = tpu.memref_slice %arg5[%c0_i32_114, %c0_i32_115] : memref<16x32xf32, #tpu.memory_space<vmem>> -> memref<1x32xf32, #tpu.memory_space<vmem>>
    %179 = tpu.memref_slice %arg6[%c0_i32_111] : memref<2x!tpu.dma_semaphore, #tpu.memory_space<semaphore_mem>> -> memref<1x!tpu.dma_semaphore, #tpu.memory_space<semaphore_mem>>
    %180 = tpu.memref_squeeze %179 : memref<1x!tpu.dma_semaphore, #tpu.memory_space<semaphore_mem>> -> memref<!tpu.dma_semaphore, #tpu.memory_space<semaphore_mem>>
    tpu.wait_dma2 semaphore(%180 : memref<!tpu.dma_semaphore, #tpu.memory_space<semaphore_mem>>) src(%177 : memref<1x32xf32, #tpu.memory_space<any>>) dst(%178 : memref<1x32xf32, #tpu.memory_space<vmem>>)
    %c0_i32_116 = arith.constant 0 : i32
    %c0_i32_117 = arith.constant 0 : i32
    %c0_i32_118 = arith.constant 0 : i32
    %181 = tpu.memref_slice %arg2[%c0_i32_117, %c0_i32_118] : memref<128x32xf32, #tpu.memory_space<any>> -> memref<1x32xf32, #tpu.memory_space<any>>
    %c0_i32_119 = arith.constant 0 : i32
    %c0_i32_120 = arith.constant 0 : i32
    %182 = tpu.memref_slice %arg5[%c0_i32_119, %c0_i32_120] : memref<16x32xf32, #tpu.memory_space<vmem>> -> memref<1x32xf32, #tpu.memory_space<vmem>>
    %183 = tpu.memref_slice %arg6[%c0_i32_116] : memref<2x!tpu.dma_semaphore, #tpu.memory_space<semaphore_mem>> -> memref<1x!tpu.dma_semaphore, #tpu.memory_space<semaphore_mem>>
    %184 = tpu.memref_squeeze %183 : memref<1x!tpu.dma_semaphore, #tpu.memory_space<semaphore_mem>> -> memref<!tpu.dma_semaphore, #tpu.memory_space<semaphore_mem>>
    tpu.wait_dma2 semaphore(%184 : memref<!tpu.dma_semaphore, #tpu.memory_space<semaphore_mem>>) src(%181 : memref<1x32xf32, #tpu.memory_space<any>>) dst(%182 : memref<1x32xf32, #tpu.memory_space<vmem>>)
    %c0_i32_121 = arith.constant 0 : i32
    %c0_i32_122 = arith.constant 0 : i32
    %c0_i32_123 = arith.constant 0 : i32
    %185 = tpu.memref_slice %arg2[%c0_i32_122, %c0_i32_123] : memref<128x32xf32, #tpu.memory_space<any>> -> memref<1x32xf32, #tpu.memory_space<any>>
    %c0_i32_124 = arith.constant 0 : i32
    %c0_i32_125 = arith.constant 0 : i32
    %186 = tpu.memref_slice %arg5[%c0_i32_124, %c0_i32_125] : memref<16x32xf32, #tpu.memory_space<vmem>> -> memref<1x32xf32, #tpu.memory_space<vmem>>
    %187 = tpu.memref_slice %arg6[%c0_i32_121] : memref<2x!tpu.dma_semaphore, #tpu.memory_space<semaphore_mem>> -> memref<1x!tpu.dma_semaphore, #tpu.memory_space<semaphore_mem>>
    %188 = tpu.memref_squeeze %187 : memref<1x!tpu.dma_semaphore, #tpu.memory_space<semaphore_mem>> -> memref<!tpu.dma_semaphore, #tpu.memory_space<semaphore_mem>>
    tpu.wait_dma2 semaphore(%188 : memref<!tpu.dma_semaphore, #tpu.memory_space<semaphore_mem>>) src(%185 : memref<1x32xf32, #tpu.memory_space<any>>) dst(%186 : memref<1x32xf32, #tpu.memory_space<vmem>>)
    %c0_i32_126 = arith.constant 0 : i32
    %c0_i32_127 = arith.constant 0 : i32
    %c0_i32_128 = arith.constant 0 : i32
    %189 = tpu.memref_slice %arg2[%c0_i32_127, %c0_i32_128] : memref<128x32xf32, #tpu.memory_space<any>> -> memref<1x32xf32, #tpu.memory_space<any>>
    %c0_i32_129 = arith.constant 0 : i32
    %c0_i32_130 = arith.constant 0 : i32
    %190 = tpu.memref_slice %arg5[%c0_i32_129, %c0_i32_130] : memref<16x32xf32, #tpu.memory_space<vmem>> -> memref<1x32xf32, #tpu.memory_space<vmem>>
    %191 = tpu.memref_slice %arg6[%c0_i32_126] : memref<2x!tpu.dma_semaphore, #tpu.memory_space<semaphore_mem>> -> memref<1x!tpu.dma_semaphore, #tpu.memory_space<semaphore_mem>>
    %192 = tpu.memref_squeeze %191 : memref<1x!tpu.dma_semaphore, #tpu.memory_space<semaphore_mem>> -> memref<!tpu.dma_semaphore, #tpu.memory_space<semaphore_mem>>
    tpu.wait_dma2 semaphore(%192 : memref<!tpu.dma_semaphore, #tpu.memory_space<semaphore_mem>>) src(%189 : memref<1x32xf32, #tpu.memory_space<any>>) dst(%190 : memref<1x32xf32, #tpu.memory_space<vmem>>)
    %c0_i32_131 = arith.constant 0 : i32
    %c0_i32_132 = arith.constant 0 : i32
    %c0_i32_133 = arith.constant 0 : i32
    %193 = tpu.memref_slice %arg2[%c0_i32_132, %c0_i32_133] : memref<128x32xf32, #tpu.memory_space<any>> -> memref<1x32xf32, #tpu.memory_space<any>>
    %c0_i32_134 = arith.constant 0 : i32
    %c0_i32_135 = arith.constant 0 : i32
    %194 = tpu.memref_slice %arg5[%c0_i32_134, %c0_i32_135] : memref<16x32xf32, #tpu.memory_space<vmem>> -> memref<1x32xf32, #tpu.memory_space<vmem>>
    %195 = tpu.memref_slice %arg6[%c0_i32_131] : memref<2x!tpu.dma_semaphore, #tpu.memory_space<semaphore_mem>> -> memref<1x!tpu.dma_semaphore, #tpu.memory_space<semaphore_mem>>
    %196 = tpu.memref_squeeze %195 : memref<1x!tpu.dma_semaphore, #tpu.memory_space<semaphore_mem>> -> memref<!tpu.dma_semaphore, #tpu.memory_space<semaphore_mem>>
    tpu.wait_dma2 semaphore(%196 : memref<!tpu.dma_semaphore, #tpu.memory_space<semaphore_mem>>) src(%193 : memref<1x32xf32, #tpu.memory_space<any>>) dst(%194 : memref<1x32xf32, #tpu.memory_space<vmem>>)
    %c0 = arith.constant 0 : index
    %c0_136 = arith.constant 0 : index
    %197 = vector.load %arg5[%c0, %c0_136] : memref<16x32xf32, #tpu.memory_space<vmem>>, vector<8x32xf32>
    %198 = arith.truncf %197 : vector<8x32xf32> to vector<8x32xbf16>
    %c0_137 = arith.constant 0 : index
    %c0_138 = arith.constant 0 : index
    %199 = vector.load %arg3[%c0_137, %c0_138] : memref<32x128xbf16, #tpu.memory_space<vmem>>, vector<32x128xbf16>
    %cst = arith.constant dense<0.000000e+00> : vector<8x128xf32>
    %200 = tpu.matmul %198, %199, %cst {dimension_numbers = #tpu.dot_dimension_numbers<[1], [0], [0], [1], [0, 0, 1, 1], [], []>} : vector<8x32xbf16>, vector<32x128xbf16>, vector<8x128xf32> -> vector<8x128xf32>
    %c0_139 = arith.constant 0 : index
    %c0_140 = arith.constant 0 : index
    %201 = vector.load %arg4[%c0_139, %c0_140] : memref<16x128xf32, #tpu.memory_space<vmem>>, vector<8x128xf32>
    tpu.vector_store %arg4[%c0_139, %c0_140], %200 {strides = array<i32>} : memref<16x128xf32, #tpu.memory_space<vmem>>, vector<8x128xf32>,
    %c0_i32_141 = arith.constant 0 : i32
    %c1_i32_142 = arith.constant 1 : i32
    %c0_i32_143 = arith.constant 0 : i32
    %c0_i32_144 = arith.constant 0 : i32
    %202 = tpu.memref_slice %arg2[%c0_i32_143, %c0_i32_144] : memref<128x32xf32, #tpu.memory_space<any>> -> memref<1x32xf32, #tpu.memory_space<any>>
    %c0_i32_145 = arith.constant 0 : i32
    %c0_i32_146 = arith.constant 0 : i32
    %203 = tpu.memref_slice %arg5[%c0_i32_145, %c0_i32_146] : memref<16x32xf32, #tpu.memory_space<vmem>> -> memref<1x32xf32, #tpu.memory_space<vmem>>
    %204 = tpu.memref_slice %arg6[%c1_i32_142] : memref<2x!tpu.dma_semaphore, #tpu.memory_space<semaphore_mem>> -> memref<1x!tpu.dma_semaphore, #tpu.memory_space<semaphore_mem>>
    %205 = tpu.memref_squeeze %204 : memref<1x!tpu.dma_semaphore, #tpu.memory_space<semaphore_mem>> -> memref<!tpu.dma_semaphore, #tpu.memory_space<semaphore_mem>>
    tpu.wait_dma2 semaphore(%205 : memref<!tpu.dma_semaphore, #tpu.memory_space<semaphore_mem>>) src(%202 : memref<1x32xf32, #tpu.memory_space<any>>) dst(%203 : memref<1x32xf32, #tpu.memory_space<vmem>>)
    %c1_i32_147 = arith.constant 1 : i32
    %c0_i32_148 = arith.constant 0 : i32
    %c0_i32_149 = arith.constant 0 : i32
    %206 = tpu.memref_slice %arg2[%c0_i32_148, %c0_i32_149] : memref<128x32xf32, #tpu.memory_space<any>> -> memref<1x32xf32, #tpu.memory_space<any>>
    %c0_i32_150 = arith.constant 0 : i32
    %c0_i32_151 = arith.constant 0 : i32
    %207 = tpu.memref_slice %arg5[%c0_i32_150, %c0_i32_151] : memref<16x32xf32, #tpu.memory_space<vmem>> -> memref<1x32xf32, #tpu.memory_space<vmem>>
    %208 = tpu.memref_slice %arg6[%c1_i32_147] : memref<2x!tpu.dma_semaphore, #tpu.memory_space<semaphore_mem>> -> memref<1x!tpu.dma_semaphore, #tpu.memory_space<semaphore_mem>>
    %209 = tpu.memref_squeeze %208 : memref<1x!tpu.dma_semaphore, #tpu.memory_space<semaphore_mem>> -> memref<!tpu.dma_semaphore, #tpu.memory_space<semaphore_mem>>
    tpu.wait_dma2 semaphore(%209 : memref<!tpu.dma_semaphore, #tpu.memory_space<semaphore_mem>>) src(%206 : memref<1x32xf32, #tpu.memory_space<any>>) dst(%207 : memref<1x32xf32, #tpu.memory_space<vmem>>)
    %c1_i32_152 = arith.constant 1 : i32
    %c0_i32_153 = arith.constant 0 : i32
    %c0_i32_154 = arith.constant 0 : i32
    %210 = tpu.memref_slice %arg2[%c0_i32_153, %c0_i32_154] : memref<128x32xf32, #tpu.memory_space<any>> -> memref<1x32xf32, #tpu.memory_space<any>>
    %c0_i32_155 = arith.constant 0 : i32
    %c0_i32_156 = arith.constant 0 : i32
    %211 = tpu.memref_slice %arg5[%c0_i32_155, %c0_i32_156] : memref<16x32xf32, #tpu.memory_space<vmem>> -> memref<1x32xf32, #tpu.memory_space<vmem>>
    %212 = tpu.memref_slice %arg6[%c1_i32_152] : memref<2x!tpu.dma_semaphore, #tpu.memory_space<semaphore_mem>> -> memref<1x!tpu.dma_semaphore, #tpu.memory_space<semaphore_mem>>
    %213 = tpu.memref_squeeze %212 : memref<1x!tpu.dma_semaphore, #tpu.memory_space<semaphore_mem>> -> memref<!tpu.dma_semaphore, #tpu.memory_space<semaphore_mem>>
    tpu.wait_dma2 semaphore(%213 : memref<!tpu.dma_semaphore, #tpu.memory_space<semaphore_mem>>) src(%210 : memref<1x32xf32, #tpu.memory_space<any>>) dst(%211 : memref<1x32xf32, #tpu.memory_space<vmem>>)
    %c1_i32_157 = arith.constant 1 : i32
    %c0_i32_158 = arith.constant 0 : i32
    %c0_i32_159 = arith.constant 0 : i32
    %214 = tpu.memref_slice %arg2[%c0_i32_158, %c0_i32_159] : memref<128x32xf32, #tpu.memory_space<any>> -> memref<1x32xf32, #tpu.memory_space<any>>
    %c0_i32_160 = arith.constant 0 : i32
    %c0_i32_161 = arith.constant 0 : i32
    %215 = tpu.memref_slice %arg5[%c0_i32_160, %c0_i32_161] : memref<16x32xf32, #tpu.memory_space<vmem>> -> memref<1x32xf32, #tpu.memory_space<vmem>>
    %216 = tpu.memref_slice %arg6[%c1_i32_157] : memref<2x!tpu.dma_semaphore, #tpu.memory_space<semaphore_mem>> -> memref<1x!tpu.dma_semaphore, #tpu.memory_space<semaphore_mem>>
    %217 = tpu.memref_squeeze %216 : memref<1x!tpu.dma_semaphore, #tpu.memory_space<semaphore_mem>> -> memref<!tpu.dma_semaphore, #tpu.memory_space<semaphore_mem>>
    tpu.wait_dma2 semaphore(%217 : memref<!tpu.dma_semaphore, #tpu.memory_space<semaphore_mem>>) src(%214 : memref<1x32xf32, #tpu.memory_space<any>>) dst(%215 : memref<1x32xf32, #tpu.memory_space<vmem>>)
    %c1_i32_162 = arith.constant 1 : i32
    %c0_i32_163 = arith.constant 0 : i32
    %c0_i32_164 = arith.constant 0 : i32
    %218 = tpu.memref_slice %arg2[%c0_i32_163, %c0_i32_164] : memref<128x32xf32, #tpu.memory_space<any>> -> memref<1x32xf32, #tpu.memory_space<any>>
    %c0_i32_165 = arith.constant 0 : i32
    %c0_i32_166 = arith.constant 0 : i32
    %219 = tpu.memref_slice %arg5[%c0_i32_165, %c0_i32_166] : memref<16x32xf32, #tpu.memory_space<vmem>> -> memref<1x32xf32, #tpu.memory_space<vmem>>
    %220 = tpu.memref_slice %arg6[%c1_i32_162] : memref<2x!tpu.dma_semaphore, #tpu.memory_space<semaphore_mem>> -> memref<1x!tpu.dma_semaphore, #tpu.memory_space<semaphore_mem>>
    %221 = tpu.memref_squeeze %220 : memref<1x!tpu.dma_semaphore, #tpu.memory_space<semaphore_mem>> -> memref<!tpu.dma_semaphore, #tpu.memory_space<semaphore_mem>>
    tpu.wait_dma2 semaphore(%221 : memref<!tpu.dma_semaphore, #tpu.memory_space<semaphore_mem>>) src(%218 : memref<1x32xf32, #tpu.memory_space<any>>) dst(%219 : memref<1x32xf32, #tpu.memory_space<vmem>>)
    %c1_i32_167 = arith.constant 1 : i32
    %c0_i32_168 = arith.constant 0 : i32
    %c0_i32_169 = arith.constant 0 : i32
    %222 = tpu.memref_slice %arg2[%c0_i32_168, %c0_i32_169] : memref<128x32xf32, #tpu.memory_space<any>> -> memref<1x32xf32, #tpu.memory_space<any>>
    %c0_i32_170 = arith.constant 0 : i32
    %c0_i32_171 = arith.constant 0 : i32
    %223 = tpu.memref_slice %arg5[%c0_i32_170, %c0_i32_171] : memref<16x32xf32, #tpu.memory_space<vmem>> -> memref<1x32xf32, #tpu.memory_space<vmem>>
    %224 = tpu.memref_slice %arg6[%c1_i32_167] : memref<2x!tpu.dma_semaphore, #tpu.memory_space<semaphore_mem>> -> memref<1x!tpu.dma_semaphore, #tpu.memory_space<semaphore_mem>>
    %225 = tpu.memref_squeeze %224 : memref<1x!tpu.dma_semaphore, #tpu.memory_space<semaphore_mem>> -> memref<!tpu.dma_semaphore, #tpu.memory_space<semaphore_mem>>
    tpu.wait_dma2 semaphore(%225 : memref<!tpu.dma_semaphore, #tpu.memory_space<semaphore_mem>>) src(%222 : memref<1x32xf32, #tpu.memory_space<any>>) dst(%223 : memref<1x32xf32, #tpu.memory_space<vmem>>)
    %c1_i32_172 = arith.constant 1 : i32
    %c0_i32_173 = arith.constant 0 : i32
    %c0_i32_174 = arith.constant 0 : i32
    %226 = tpu.memref_slice %arg2[%c0_i32_173, %c0_i32_174] : memref<128x32xf32, #tpu.memory_space<any>> -> memref<1x32xf32, #tpu.memory_space<any>>
    %c0_i32_175 = arith.constant 0 : i32
    %c0_i32_176 = arith.constant 0 : i32
    %227 = tpu.memref_slice %arg5[%c0_i32_175, %c0_i32_176] : memref<16x32xf32, #tpu.memory_space<vmem>> -> memref<1x32xf32, #tpu.memory_space<vmem>>
    %228 = tpu.memref_slice %arg6[%c1_i32_172] : memref<2x!tpu.dma_semaphore, #tpu.memory_space<semaphore_mem>> -> memref<1x!tpu.dma_semaphore, #tpu.memory_space<semaphore_mem>>
    %229 = tpu.memref_squeeze %228 : memref<1x!tpu.dma_semaphore, #tpu.memory_space<semaphore_mem>> -> memref<!tpu.dma_semaphore, #tpu.memory_space<semaphore_mem>>
    tpu.wait_dma2 semaphore(%229 : memref<!tpu.dma_semaphore, #tpu.memory_space<semaphore_mem>>) src(%226 : memref<1x32xf32, #tpu.memory_space<any>>) dst(%227 : memref<1x32xf32, #tpu.memory_space<vmem>>)
    %c1_i32_177 = arith.constant 1 : i32
    %c0_i32_178 = arith.constant 0 : i32
    %c0_i32_179 = arith.constant 0 : i32
    %230 = tpu.memref_slice %arg2[%c0_i32_178, %c0_i32_179] : memref<128x32xf32, #tpu.memory_space<any>> -> memref<1x32xf32, #tpu.memory_space<any>>
    %c0_i32_180 = arith.constant 0 : i32
    %c0_i32_181 = arith.constant 0 : i32
    %231 = tpu.memref_slice %arg5[%c0_i32_180, %c0_i32_181] : memref<16x32xf32, #tpu.memory_space<vmem>> -> memref<1x32xf32, #tpu.memory_space<vmem>>
    %232 = tpu.memref_slice %arg6[%c1_i32_177] : memref<2x!tpu.dma_semaphore, #tpu.memory_space<semaphore_mem>> -> memref<1x!tpu.dma_semaphore, #tpu.memory_space<semaphore_mem>>
    %233 = tpu.memref_squeeze %232 : memref<1x!tpu.dma_semaphore, #tpu.memory_space<semaphore_mem>> -> memref<!tpu.dma_semaphore, #tpu.memory_space<semaphore_mem>>
    tpu.wait_dma2 semaphore(%233 : memref<!tpu.dma_semaphore, #tpu.memory_space<semaphore_mem>>) src(%230 : memref<1x32xf32, #tpu.memory_space<any>>) dst(%231 : memref<1x32xf32, #tpu.memory_space<vmem>>)
    %c8 = arith.constant 8 : index
    %c0_182 = arith.constant 0 : index
    %234 = vector.load %arg5[%c8, %c0_182] : memref<16x32xf32, #tpu.memory_space<vmem>>, vector<8x32xf32>
    %235 = arith.truncf %234 : vector<8x32xf32> to vector<8x32xbf16>
    %c0_183 = arith.constant 0 : index
    %c0_184 = arith.constant 0 : index
    %236 = vector.load %arg3[%c0_183, %c0_184] : memref<32x128xbf16, #tpu.memory_space<vmem>>, vector<32x128xbf16>
    %cst_185 = arith.constant dense<0.000000e+00> : vector<8x128xf32>
    %237 = tpu.matmul %235, %236, %cst_185 {dimension_numbers = #tpu.dot_dimension_numbers<[1], [0], [0], [1], [0, 0, 1, 1], [], []>} : vector<8x32xbf16>, vector<32x128xbf16>, vector<8x128xf32> -> vector<8x128xf32>
    %c8_186 = arith.constant 8 : index
    %c0_187 = arith.constant 0 : index
    %238 = vector.load %arg4[%c8_186, %c0_187] : memref<16x128xf32, #tpu.memory_space<vmem>>, vector<8x128xf32>
    tpu.vector_store %arg4[%c8_186, %c0_187], %237 {strides = array<i32>} : memref<16x128xf32, #tpu.memory_space<vmem>>, vector<8x128xf32>,
    return
  }
  func.func @transform_1(%arg0: i32, %arg1: memref<32xi32, #tpu.memory_space<smem>>) -> (i32, i32) {
    %c0_i32 = arith.constant 0 : i32
    %c0_i32_0 = arith.constant 0 : i32
    %c0_i32_1 = arith.constant 0 : i32
    return %c0_i32, %c0_i32_0 : i32, i32
  }
  func.func @transform_2(%arg0: i32, %arg1: memref<32xi32, #tpu.memory_space<smem>>) -> (i32, i32) {
    %c0_i32 = arith.constant 0 : i32
    %c0_i32_0 = arith.constant 0 : i32
    return %arg0, %c0_i32 : i32, i32
  }
}

</mosaic_0001>

<llo_original>
// kernel: tpu_custom_call.1
$region0: #{tpu_custom_call.1}
  #allocation0 [shape = 'u32[]', space=smem, size = 0x4, offset = 0x4, fixed_abs, tag = 'smem constant byte address 0x4 - core index']
  #allocation1 [shape = 'u32[144,128]{1,0:T(1,128)}', space=vmem, size = 0x12000, scoped, tag = 'internal scratch']
  #allocation2 [shape = 'f32[16,32]{1,0:T(8,128)}', space=vmem, size = 0x2000, scoped, tag = 'scratch operand']
  #allocation3 [shape = 's32[2]{0}', space=sflag, size = 0x8, scoped, tag = 'scratch operand']
  #allocation4 [shape = 's32[1]{0}', space=sflag, size = 0x4, scoped, tag = 'scoped memory for tpu_custom_call.1']
  #allocation5 [shape = 'u8[512]{0}', space=smem, size = 0x200, scoped, tag = 'prefetched SMEM operand 0']
  #allocation8 [shape = 's32[]', space=sflag, size = 0x4, offset = 0, fixed_abs, tag = 'sflag constant byte address 0x0 - dummy sync flag']
  #allocation9 [shape = 's32[]', space=sflag, size = 0x4, offset = 0, fixed_abs, tag = 'sflag constant byte address 0x0 - dummy sync flag']
  #allocation10 [shape = 's32[]', space=sflag, size = 0x4, offset = 0, fixed_abs, tag = 'sflag constant byte address 0x0 - dummy sync flag']
  #allocation11 [shape = 's32[]', space=sflag, size = 0x4, offset = 0, fixed_abs, tag = 'sflag constant byte address 0x0 - dummy sync flag']
  #allocation12 [shape = 's32[]', space=sflag, size = 0x4, offset = 0, fixed_abs, tag = 'sflag constant byte address 0x0 - dummy sync flag']
  #allocation13 [shape = 's32[]', space=sflag, size = 0x4, offset = 0, fixed_abs, tag = 'sflag constant byte address 0x0 - dummy sync flag']
  #allocation14 [shape = 's32[]', space=sflag, size = 0x4, offset = 0, fixed_abs, tag = 'sflag constant byte address 0x0 - dummy sync flag']
  #allocation15 [shape = 's32[]', space=sflag, size = 0x4, offset = 0, fixed_abs, tag = 'sflag constant byte address 0x0 - dummy sync flag']
  #allocation16 [shape = 's32[]', space=sflag, size = 0x4, offset = 0, fixed_abs, tag = 'sflag constant byte address 0x0 - dummy sync flag']
  #allocation17 [shape = 's32[]', space=sflag, size = 0x4, offset = 0, fixed_abs, tag = 'sflag constant byte address 0x0 - dummy sync flag']
  #allocation18 [shape = 's32[]', space=sflag, size = 0x4, offset = 0, fixed_abs, tag = 'sflag constant byte address 0x0 - dummy sync flag']
  #allocation19 [shape = 's32[]', space=sflag, size = 0x4, offset = 0, fixed_abs, tag = 'sflag constant byte address 0x0 - dummy sync flag']
  #allocation20 [shape = 's32[]', space=sflag, size = 0x4, offset = 0, fixed_abs, tag = 'sflag constant byte address 0x0 - dummy sync flag']
  #allocation21 [shape = 's32[]', space=sflag, size = 0x4, offset = 0, fixed_abs, tag = 'sflag constant byte address 0x0 - dummy sync flag']
  #allocation22 [shape = 's32[]', space=sflag, size = 0x4, offset = 0, fixed_abs, tag = 'sflag constant byte address 0x0 - dummy sync flag']
  #allocation23 [shape = 's32[]', space=sflag, size = 0x4, offset = 0, fixed_abs, tag = 'sflag constant byte address 0x0 - dummy sync flag']
  %s0 = inlined_call_operand.vmem [shape: s32[32], index: 0, kind: input, shape index: {}]
  %s1 = inlined_call_operand.vmem [shape: f32[128,32], index: 1, kind: input, shape index: {}]
  %s2 = inlined_call_operand.vmem [shape: bf16[32,128], index: 2, kind: input, shape index: {}]
  %s3 = inlined_call_operand.hbm [shape: f32[32,128], index: 3, kind: output, shape index: {}]
  %s4 = sld [smem:[#allocation0]]
  $region517: #{tpu_custom_call.1} parent=0
    _
  %s6 = ssub.s32 1, %s4
  %s7 = scalar_select 0, %s6, %s4
  %s8 = sshll.u32 %s0, 4
  %s9 = int_to_ptr.vmem [resolvable:$true] %s8
  %11 = dma.vmem_to_smem %s9, 16, [#allocation5], [#allocation4]
  %12 = dma.done [#allocation4], 16
  %13 = sfence
  $region1: #{tpu_custom_call.1} parent=0
    #allocation6 [shape = 'u8[16384]{0}', space=vmem, size = 0x4000, scoped, tag = 'output window, operand 0']
    #allocation7 [shape = 's32[2]{0}', space=sflag, size = 0x8, scoped, tag = 'scoped memory for tpu_custom_call.1']
    %14 = vsyncpa [#allocation7], 0
    %s15 = scalar_lea.sflag [#allocation7], 1
    %16 = vsyncpa %s15, 0
    loop: start=0, step=1, limit=4
    $region2: #{tpu_custom_call.1} parent=1 // loop_pre_header
      _
    $region3: #{tpu_custom_call.1} parent=1 // loop_header
      %s18 = sphi 0, %s22
      %p19 = scmp.ge.s32.totalorder %s18, 4
      %s26 = sphi 0, %s26
      %s28 = sphi 0, %s26
      %s29 = sphi 0, %s28
      %s43 = sphi 0, %s29
      %s49 = sphi 0, %s51
      %s52 = sphi 0, %s49
      %s53 = sphi 0, %s52
      %s69 = sphi 0, %s53
    $region4: #{tpu_custom_call.1} parent=1 // loop_header_branch
      %21 = sbr.rel (%p19) target = $region8
    $region5: #{tpu_custom_call.1} parent=1 // loop_body
      %s23 = ssub.s32 %s18, 1
      %s24 = ssub.s32 %s18, 2
      %s25 = sadd.s32 %s18, 1
      %s27 = sadd.s32 %s26, 1
      %p30 = scmp.eq.s32.totalorder %s18, 1
      %p31 = scmp.ne.s32.totalorder %s26, %s28
      %p32 = scmp.eq.s32.totalorder %s18, 0
      %p33 = por %p31, %p32
      %p34 = scmp.ne.s32.totalorder %s26, %s28
      %p35 = scmp.eq.s32.totalorder %s23, 1
      %p36 = por %p34, %p35
      %p37 = scmp.ne.s32.totalorder %s28, %s29
      %p38 = scmp.eq.s32.totalorder %s23, 0
      %p39 = por %p37, %p38
      %p40 = scmp.ne.s32.totalorder %s28, %s29
      %p41 = scmp.eq.s32.totalorder %s24, 1
      %p42 = por %p40, %p41
      %p44 = scmp.ne.s32.totalorder %s29, %s43
      %p45 = scmp.eq.s32.totalorder %s24, 0
      %p46 = por %p44, %p45
      %s47 = ssub.s32 %s18, %s25
      %p48 = scmp.eq.s32.totalorder %s47, 0
      %s50 = sadd.s32 %s49, 1
      %s51 = scalar_select %p48, %s49, %s50
      %p54 = pneg %p48
      %p55 = scmp.eq.s32.totalorder %s18, 1
      %p56 = por %p54, %p55
      %p57 = scmp.ne.s32.totalorder %s49, %s52
      %p58 = scmp.eq.s32.totalorder %s18, 0
      %p59 = por %p57, %p58
      %p60 = scmp.ne.s32.totalorder %s49, %s52
      %p61 = scmp.eq.s32.totalorder %s23, 1
      %p62 = por %p60, %p61
      %p63 = scmp.ne.s32.totalorder %s52, %s53
      %p64 = scmp.eq.s32.totalorder %s23, 0
      %p65 = por %p63, %p64
      %p66 = scmp.ne.s32.totalorder %s52, %s53
      %p67 = scmp.eq.s32.totalorder %s24, 1
      %p68 = por %p66, %p67
      %p70 = scmp.ne.s32.totalorder %s53, %s69
      %p71 = scmp.eq.s32.totalorder %s24, 0
      %p72 = por %p70, %p71
      %p73 = scmp.le.s32.totalorder 1, %s18
      %p74 = scmp.lt.s32.totalorder %s18, 3
      %p75 = pnand %p73, %p74
      %p76 = pneg %p75
      // Predicated region
      $region9: #{tpu_custom_call.1} parent=5 // pred_check
        _
      $region10: #{tpu_custom_call.1} parent=5 // pred_check_branch
        %78 = sbr.rel (%p75) target = $region12
      $region11: #{tpu_custom_call.1} parent=5 // pred_region
        %s79 = ssub.s32 %s18, 1
        // Predicated region
        $region13: #{tpu_custom_call.1} parent=11 // pred_check
          %p80 = pneg %p39
        $region14: #{tpu_custom_call.1} parent=11 // pred_check_branch
          %82 = sbr.rel (%p80) target = $region16
        $region15: #{tpu_custom_call.1} parent=11 // pred_region
          _
        $region16: #{tpu_custom_call.1} parent=11 // pred_fallthru
          _
      $region12: #{tpu_custom_call.1} parent=5 // pred_fallthru
        _
      %p83 = scmp.lt.s32.totalorder %s18, 2
      // Predicated region
      $region17: #{tpu_custom_call.1} parent=5 // pred_check
        %p84 = pneg %p83
      $region18: #{tpu_custom_call.1} parent=5 // pred_check_branch
        %86 = sbr.rel (%p84) target = $region20
      $region19: #{tpu_custom_call.1} parent=5 // pred_region
        _
      $region20: #{tpu_custom_call.1} parent=5 // pred_fallthru
        _
      %p87 = scmp.le.s32.totalorder 1, %s18
      %p88 = scmp.lt.s32.totalorder %s18, 3
      %p89 = pnand %p87, %p88
      %p90 = pneg %p89
      // Predicated region
      $region21: #{tpu_custom_call.1} parent=5 // pred_check
        _
      $region22: #{tpu_custom_call.1} parent=5 // pred_check_branch
        %92 = sbr.rel (%p89) target = $region24
      $region23: #{tpu_custom_call.1} parent=5 // pred_region
        %s93 = ssub.s32 %s18, 1
        %p94 = pneg %p39
        %p95 = pneg %p36
        %p96 = pneg %p65
        %p97 = pneg %p62
        %s98 = sand.u32 %s52, 1
        %s99 = scalar_lea.sflag [#allocation7], %s98
        %s100 = sand.u32 %s52, 1
        %s101 = smul.addr %s100, 16
        %s102 = scalar_lea.vmem [#allocation6], %s101
        %s103 = smul.u32 2, %s23
        %s105 = smul.u32 %s23, 16
        %s106 = sld [smem:[#allocation5 + %s105]]
        %s107 = scalar_lea.vmem %s1, %s106
        %p109 = scmp.lt.u32.totalorder 1, 8
        %p110 = pneg %p109
        // Predicated region
        $region25: #{tpu_custom_call.1} parent=23 // pred_check
          _
        $region26: #{tpu_custom_call.1} parent=23 // pred_check_branch
          %112 = sbr.rel (%p109) target = $region28
        $region27: #{tpu_custom_call.1} parent=23 // pred_region
          %s127 = sand.u32 1, 7
          %p128 = scmp.eq.s32.totalorder %s127, 0
          %p129 = pneg %p128
          // Predicated region
          $region40: #{tpu_custom_call.1} parent=27 // pred_check
            _
          $region41: #{tpu_custom_call.1} parent=27 // pred_check_branch
            %131 = sbr.rel (%p128) target = $region43
          $region42: #{tpu_custom_call.1} parent=27 // pred_region
            %s132 = sand.u32 1, 7
            %s133 = ssub.s32 1, %s132
            %s134 = scalar_lea.vmem %s107, %s133
            %s135 = ssub.s32 1, %s132
            %s136 = scalar_lea.vmem [#allocation2], %s135
            %s137 = sshllo.u32 0, %s132
            loop: start=0, step=1, limit=1
            $region44: #{tpu_custom_call.1} parent=42 // loop_pre_header
              _
            $region45: #{tpu_custom_call.1} parent=42 // loop_header
              %s139 = sphi 0, %s143
              %p140 = scmp.ge.s32.totalorder %s139, 1
              %s144 = sphi %s134, %s134
              %s145 = sphi %s136, %s136
            $region46: #{tpu_custom_call.1} parent=42 // loop_header_branch
              %142 = sbr.rel (%p140) target = $region50
            $region47: #{tpu_custom_call.1} parent=42 // loop_body
              %v146 = vld [vmem:[%s144] sm:%s137]
              %147 = vst [vmem:[%s145] sm:%s137] %v146
            $region48: #{tpu_custom_call.1} parent=42 // loop_footer
              %s143 = sadd.s32 1, %s139
            $region49: #{tpu_custom_call.1} parent=42 // loop_footer_branch
              %138 = sbr.rel target = $region45
            $region50: #{tpu_custom_call.1} parent=42 // loop_exit
              _
          $region43: #{tpu_custom_call.1} parent=27 // pred_fallthru
            _
        $region28: #{tpu_custom_call.1} parent=23 // pred_fallthru
          _
        // Predicated region
        $region29: #{tpu_custom_call.1} parent=23 // pred_check
          %p113 = pneg %p109
        $region30: #{tpu_custom_call.1} parent=23 // pred_check_branch
          %115 = sbr.rel (%p113) target = $region32
        $region31: #{tpu_custom_call.1} parent=23 // pred_region
          %s116 = sshllo.u32 0, 1
          loop: start=0, step=1, limit=1
          $region33: #{tpu_custom_call.1} parent=31 // loop_pre_header
            _
          $region34: #{tpu_custom_call.1} parent=31 // loop_header
            %s118 = sphi 0, %s122
            %p119 = scmp.ge.s32.totalorder %s118, 1
            %s123 = sphi %s107, %s107
            %s124 = sphi [#allocation2], [#allocation2]
          $region35: #{tpu_custom_call.1} parent=31 // loop_header_branch
            %121 = sbr.rel (%p119) target = $region39
          $region36: #{tpu_custom_call.1} parent=31 // loop_body
            %v125 = vld [vmem:[%s123] sm:%s116]
            %126 = vst [vmem:[%s124] sm:%s116] %v125
          $region37: #{tpu_custom_call.1} parent=31 // loop_footer
            %s122 = sadd.s32 1, %s118
          $region38: #{tpu_custom_call.1} parent=31 // loop_footer_branch
            %117 = sbr.rel target = $region34
          $region39: #{tpu_custom_call.1} parent=31 // loop_exit
            _
        $region32: #{tpu_custom_call.1} parent=23 // pred_fallthru
          _
        // Predicated region
        $region51: #{tpu_custom_call.1} parent=23 // pred_check
          _
        $region52: #{tpu_custom_call.1} parent=23 // pred_check_branch
          %150 = sbr.rel (0) target = $region54
        $region53: #{tpu_custom_call.1} parent=23 // pred_region
          %151 = vsyncadd [#allocation3], 16
        $region54: #{tpu_custom_call.1} parent=23 // pred_fallthru
          _
        %s152 = sadd.s32 %s105, 1
        %s153 = sld [smem:[#allocation5 + %s152]]
        %s154 = scalar_lea.vmem %s1, %s153
        %s155 = scalar_lea.vmem [#allocation2], 1
        %p157 = scmp.lt.u32.totalorder 1, 8
        %p158 = pneg %p157
        // Predicated region
        $region55: #{tpu_custom_call.1} parent=23 // pred_check
          _
        $region56: #{tpu_custom_call.1} parent=23 // pred_check_branch
          %160 = sbr.rel (%p157) target = $region58
        $region57: #{tpu_custom_call.1} parent=23 // pred_region
          %s175 = sand.u32 1, 7
          %p176 = scmp.eq.s32.totalorder %s175, 0
          %p177 = pneg %p176
          // Predicated region
          $region70: #{tpu_custom_call.1} parent=57 // pred_check
            _
          $region71: #{tpu_custom_call.1} parent=57 // pred_check_branch
            %179 = sbr.rel (%p176) target = $region73
          $region72: #{tpu_custom_call.1} parent=57 // pred_region
            %s180 = sand.u32 1, 7
            %s181 = ssub.s32 1, %s180
            %s182 = scalar_lea.vmem %s154, %s181
            %s183 = ssub.s32 1, %s180
            %s184 = scalar_lea.vmem %s155, %s183 [#allocation2]
            %s185 = sshllo.u32 0, %s180
            loop: start=0, step=1, limit=1
            $region74: #{tpu_custom_call.1} parent=72 // loop_pre_header
              _
            $region75: #{tpu_custom_call.1} parent=72 // loop_header
              %s187 = sphi 0, %s191
              %p188 = scmp.ge.s32.totalorder %s187, 1
              %s192 = sphi %s182, %s182
              %s193 = sphi %s184, %s184
            $region76: #{tpu_custom_call.1} parent=72 // loop_header_branch
              %190 = sbr.rel (%p188) target = $region80
            $region77: #{tpu_custom_call.1} parent=72 // loop_body
              %v194 = vld [vmem:[%s192] sm:%s185]
              %195 = vst [vmem:[%s193] sm:%s185] %v194
            $region78: #{tpu_custom_call.1} parent=72 // loop_footer
              %s191 = sadd.s32 1, %s187
            $region79: #{tpu_custom_call.1} parent=72 // loop_footer_branch
              %186 = sbr.rel target = $region75
            $region80: #{tpu_custom_call.1} parent=72 // loop_exit
              _
          $region73: #{tpu_custom_call.1} parent=57 // pred_fallthru
            _
        $region58: #{tpu_custom_call.1} parent=23 // pred_fallthru
          _
        // Predicated region
        $region59: #{tpu_custom_call.1} parent=23 // pred_check
          %p161 = pneg %p157
        $region60: #{tpu_custom_call.1} parent=23 // pred_check_branch
          %163 = sbr.rel (%p161) target = $region62
        $region61: #{tpu_custom_call.1} parent=23 // pred_region
          %s164 = sshllo.u32 0, 1
          loop: start=0, step=1, limit=1
          $region63: #{tpu_custom_call.1} parent=61 // loop_pre_header
            _
          $region64: #{tpu_custom_call.1} parent=61 // loop_header
            %s166 = sphi 0, %s170
            %p167 = scmp.ge.s32.totalorder %s166, 1
            %s171 = sphi %s154, %s154
            %s172 = sphi %s155, %s155
          $region65: #{tpu_custom_call.1} parent=61 // loop_header_branch
            %169 = sbr.rel (%p167) target = $region69
          $region66: #{tpu_custom_call.1} parent=61 // loop_body
            %v173 = vld [vmem:[%s171] sm:%s164]
            %174 = vst [vmem:[%s172] sm:%s164] %v173
          $region67: #{tpu_custom_call.1} parent=61 // loop_footer
            %s170 = sadd.s32 1, %s166
          $region68: #{tpu_custom_call.1} parent=61 // loop_footer_branch
            %165 = sbr.rel target = $region64
          $region69: #{tpu_custom_call.1} parent=61 // loop_exit
            _
        $region62: #{tpu_custom_call.1} parent=23 // pred_fallthru
          _
        // Predicated region
        $region81: #{tpu_custom_call.1} parent=23 // pred_check
          _
        $region82: #{tpu_custom_call.1} parent=23 // pred_check_branch
          %198 = sbr.rel (0) target = $region84
        $region83: #{tpu_custom_call.1} parent=23 // pred_region
          %199 = vsyncadd [#allocation3], 16
        $region84: #{tpu_custom_call.1} parent=23 // pred_fallthru
          _
        %s200 = sadd.s32 %s105, 2
        %s201 = sld [smem:[#allocation5 + %s200]]
        %s202 = scalar_lea.vmem %s1, %s201
        %s203 = scalar_lea.vmem [#allocation2], 2
        %p205 = scmp.lt.u32.totalorder 1, 8
        %p206 = pneg %p205
        // Predicated region
        $region85: #{tpu_custom_call.1} parent=23 // pred_check
          _
        $region86: #{tpu_custom_call.1} parent=23 // pred_check_branch
          %208 = sbr.rel (%p205) target = $region88
        $region87: #{tpu_custom_call.1} parent=23 // pred_region
          %s223 = sand.u32 1, 7
          %p224 = scmp.eq.s32.totalorder %s223, 0
          %p225 = pneg %p224
          // Predicated region
          $region100: #{tpu_custom_call.1} parent=87 // pred_check
            _
          $region101: #{tpu_custom_call.1} parent=87 // pred_check_branch
            %227 = sbr.rel (%p224) target = $region103
          $region102: #{tpu_custom_call.1} parent=87 // pred_region
            %s228 = sand.u32 1, 7
            %s229 = ssub.s32 1, %s228
            %s230 = scalar_lea.vmem %s202, %s229
            %s231 = ssub.s32 1, %s228
            %s232 = scalar_lea.vmem %s203, %s231 [#allocation2]
            %s233 = sshllo.u32 0, %s228
            loop: start=0, step=1, limit=1
            $region104: #{tpu_custom_call.1} parent=102 // loop_pre_header
              _
            $region105: #{tpu_custom_call.1} parent=102 // loop_header
              %s235 = sphi 0, %s239
              %p236 = scmp.ge.s32.totalorder %s235, 1
              %s240 = sphi %s230, %s230
              %s241 = sphi %s232, %s232
            $region106: #{tpu_custom_call.1} parent=102 // loop_header_branch
              %238 = sbr.rel (%p236) target = $region110
            $region107: #{tpu_custom_call.1} parent=102 // loop_body
              %v242 = vld [vmem:[%s240] sm:%s233]
              %243 = vst [vmem:[%s241] sm:%s233] %v242
            $region108: #{tpu_custom_call.1} parent=102 // loop_footer
              %s239 = sadd.s32 1, %s235
            $region109: #{tpu_custom_call.1} parent=102 // loop_footer_branch
              %234 = sbr.rel target = $region105
            $region110: #{tpu_custom_call.1} parent=102 // loop_exit
              _
          $region103: #{tpu_custom_call.1} parent=87 // pred_fallthru
            _
        $region88: #{tpu_custom_call.1} parent=23 // pred_fallthru
          _
        // Predicated region
        $region89: #{tpu_custom_call.1} parent=23 // pred_check
          %p209 = pneg %p205
        $region90: #{tpu_custom_call.1} parent=23 // pred_check_branch
          %211 = sbr.rel (%p209) target = $region92
        $region91: #{tpu_custom_call.1} parent=23 // pred_region
          %s212 = sshllo.u32 0, 1
          loop: start=0, step=1, limit=1
          $region93: #{tpu_custom_call.1} parent=91 // loop_pre_header
            _
          $region94: #{tpu_custom_call.1} parent=91 // loop_header
            %s214 = sphi 0, %s218
            %p215 = scmp.ge.s32.totalorder %s214, 1
            %s219 = sphi %s202, %s202
            %s220 = sphi %s203, %s203
          $region95: #{tpu_custom_call.1} parent=91 // loop_header_branch
            %217 = sbr.rel (%p215) target = $region99
          $region96: #{tpu_custom_call.1} parent=91 // loop_body
            %v221 = vld [vmem:[%s219] sm:%s212]
            %222 = vst [vmem:[%s220] sm:%s212] %v221
          $region97: #{tpu_custom_call.1} parent=91 // loop_footer
            %s218 = sadd.s32 1, %s214
          $region98: #{tpu_custom_call.1} parent=91 // loop_footer_branch
            %213 = sbr.rel target = $region94
          $region99: #{tpu_custom_call.1} parent=91 // loop_exit
            _
        $region92: #{tpu_custom_call.1} parent=23 // pred_fallthru
          _
        // Predicated region
        $region111: #{tpu_custom_call.1} parent=23 // pred_check
          _
        $region112: #{tpu_custom_call.1} parent=23 // pred_check_branch
          %246 = sbr.rel (0) target = $region114
        $region113: #{tpu_custom_call.1} parent=23 // pred_region
          %247 = vsyncadd [#allocation3], 16
        $region114: #{tpu_custom_call.1} parent=23 // pred_fallthru
          _
        %s248 = sadd.s32 %s105, 3
        %s249 = sld [smem:[#allocation5 + %s248]]
        %s250 = scalar_lea.vmem %s1, %s249
        %s251 = scalar_lea.vmem [#allocation2], 3
        %p253 = scmp.lt.u32.totalorder 1, 8
        %p254 = pneg %p253
        // Predicated region
        $region115: #{tpu_custom_call.1} parent=23 // pred_check
          _
        $region116: #{tpu_custom_call.1} parent=23 // pred_check_branch
          %256 = sbr.rel (%p253) target = $region118
        $region117: #{tpu_custom_call.1} parent=23 // pred_region
          %s271 = sand.u32 1, 7
          %p272 = scmp.eq.s32.totalorder %s271, 0
          %p273 = pneg %p272
          // Predicated region
          $region130: #{tpu_custom_call.1} parent=117 // pred_check
            _
          $region131: #{tpu_custom_call.1} parent=117 // pred_check_branch
            %275 = sbr.rel (%p272) target = $region133
          $region132: #{tpu_custom_call.1} parent=117 // pred_region
            %s276 = sand.u32 1, 7
            %s277 = ssub.s32 1, %s276
            %s278 = scalar_lea.vmem %s250, %s277
            %s279 = ssub.s32 1, %s276
            %s280 = scalar_lea.vmem %s251, %s279 [#allocation2]
            %s281 = sshllo.u32 0, %s276
            loop: start=0, step=1, limit=1
            $region134: #{tpu_custom_call.1} parent=132 // loop_pre_header
              _
            $region135: #{tpu_custom_call.1} parent=132 // loop_header
              %s283 = sphi 0, %s287
              %p284 = scmp.ge.s32.totalorder %s283, 1
              %s288 = sphi %s278, %s278
              %s289 = sphi %s280, %s280
            $region136: #{tpu_custom_call.1} parent=132 // loop_header_branch
              %286 = sbr.rel (%p284) target = $region140
            $region137: #{tpu_custom_call.1} parent=132 // loop_body
              %v290 = vld [vmem:[%s288] sm:%s281]
              %291 = vst [vmem:[%s289] sm:%s281] %v290
            $region138: #{tpu_custom_call.1} parent=132 // loop_footer
              %s287 = sadd.s32 1, %s283
            $region139: #{tpu_custom_call.1} parent=132 // loop_footer_branch
              %282 = sbr.rel target = $region135
            $region140: #{tpu_custom_call.1} parent=132 // loop_exit
              _
          $region133: #{tpu_custom_call.1} parent=117 // pred_fallthru
            _
        $region118: #{tpu_custom_call.1} parent=23 // pred_fallthru
          _
        // Predicated region
        $region119: #{tpu_custom_call.1} parent=23 // pred_check
          %p257 = pneg %p253
        $region120: #{tpu_custom_call.1} parent=23 // pred_check_branch
          %259 = sbr.rel (%p257) target = $region122
        $region121: #{tpu_custom_call.1} parent=23 // pred_region
          %s260 = sshllo.u32 0, 1
          loop: start=0, step=1, limit=1
          $region123: #{tpu_custom_call.1} parent=121 // loop_pre_header
            _
          $region124: #{tpu_custom_call.1} parent=121 // loop_header
            %s262 = sphi 0, %s266
            %p263 = scmp.ge.s32.totalorder %s262, 1
            %s267 = sphi %s250, %s250
            %s268 = sphi %s251, %s251
          $region125: #{tpu_custom_call.1} parent=121 // loop_header_branch
            %265 = sbr.rel (%p263) target = $region129
          $region126: #{tpu_custom_call.1} parent=121 // loop_body
            %v269 = vld [vmem:[%s267] sm:%s260]
            %270 = vst [vmem:[%s268] sm:%s260] %v269
          $region127: #{tpu_custom_call.1} parent=121 // loop_footer
            %s266 = sadd.s32 1, %s262
          $region128: #{tpu_custom_call.1} parent=121 // loop_footer_branch
            %261 = sbr.rel target = $region124
          $region129: #{tpu_custom_call.1} parent=121 // loop_exit
            _
        $region122: #{tpu_custom_call.1} parent=23 // pred_fallthru
          _
        // Predicated region
        $region141: #{tpu_custom_call.1} parent=23 // pred_check
          _
        $region142: #{tpu_custom_call.1} parent=23 // pred_check_branch
          %294 = sbr.rel (0) target = $region144
        $region143: #{tpu_custom_call.1} parent=23 // pred_region
          %295 = vsyncadd [#allocation3], 16
        $region144: #{tpu_custom_call.1} parent=23 // pred_fallthru
          _
        %s296 = sadd.s32 %s105, 4
        %s297 = sld [smem:[#allocation5 + %s296]]
        %s298 = scalar_lea.vmem %s1, %s297
        %s299 = scalar_lea.vmem [#allocation2], 4
        %p301 = scmp.lt.u32.totalorder 1, 8
        %p302 = pneg %p301
        // Predicated region
        $region145: #{tpu_custom_call.1} parent=23 // pred_check
          _
        $region146: #{tpu_custom_call.1} parent=23 // pred_check_branch
          %304 = sbr.rel (%p301) target = $region148
        $region147: #{tpu_custom_call.1} parent=23 // pred_region
          %s319 = sand.u32 1, 7
          %p320 = scmp.eq.s32.totalorder %s319, 0
          %p321 = pneg %p320
          // Predicated region
          $region160: #{tpu_custom_call.1} parent=147 // pred_check
            _
          $region161: #{tpu_custom_call.1} parent=147 // pred_check_branch
            %323 = sbr.rel (%p320) target = $region163
          $region162: #{tpu_custom_call.1} parent=147 // pred_region
            %s324 = sand.u32 1, 7
            %s325 = ssub.s32 1, %s324
            %s326 = scalar_lea.vmem %s298, %s325
            %s327 = ssub.s32 1, %s324
            %s328 = scalar_lea.vmem %s299, %s327 [#allocation2]
            %s329 = sshllo.u32 0, %s324
            loop: start=0, step=1, limit=1
            $region164: #{tpu_custom_call.1} parent=162 // loop_pre_header
              _
            $region165: #{tpu_custom_call.1} parent=162 // loop_header
              %s331 = sphi 0, %s335
              %p332 = scmp.ge.s32.totalorder %s331, 1
              %s336 = sphi %s326, %s326
              %s337 = sphi %s328, %s328
            $region166: #{tpu_custom_call.1} parent=162 // loop_header_branch
              %334 = sbr.rel (%p332) target = $region170
            $region167: #{tpu_custom_call.1} parent=162 // loop_body
              %v338 = vld [vmem:[%s336] sm:%s329]
              %339 = vst [vmem:[%s337] sm:%s329] %v338
            $region168: #{tpu_custom_call.1} parent=162 // loop_footer
              %s335 = sadd.s32 1, %s331
            $region169: #{tpu_custom_call.1} parent=162 // loop_footer_branch
              %330 = sbr.rel target = $region165
            $region170: #{tpu_custom_call.1} parent=162 // loop_exit
              _
          $region163: #{tpu_custom_call.1} parent=147 // pred_fallthru
            _
        $region148: #{tpu_custom_call.1} parent=23 // pred_fallthru
          _
        // Predicated region
        $region149: #{tpu_custom_call.1} parent=23 // pred_check
          %p305 = pneg %p301
        $region150: #{tpu_custom_call.1} parent=23 // pred_check_branch
          %307 = sbr.rel (%p305) target = $region152
        $region151: #{tpu_custom_call.1} parent=23 // pred_region
          %s308 = sshllo.u32 0, 1
          loop: start=0, step=1, limit=1
          $region153: #{tpu_custom_call.1} parent=151 // loop_pre_header
            _
          $region154: #{tpu_custom_call.1} parent=151 // loop_header
            %s310 = sphi 0, %s314
            %p311 = scmp.ge.s32.totalorder %s310, 1
            %s315 = sphi %s298, %s298
            %s316 = sphi %s299, %s299
          $region155: #{tpu_custom_call.1} parent=151 // loop_header_branch
            %313 = sbr.rel (%p311) target = $region159
          $region156: #{tpu_custom_call.1} parent=151 // loop_body
            %v317 = vld [vmem:[%s315] sm:%s308]
            %318 = vst [vmem:[%s316] sm:%s308] %v317
          $region157: #{tpu_custom_call.1} parent=151 // loop_footer
            %s314 = sadd.s32 1, %s310
          $region158: #{tpu_custom_call.1} parent=151 // loop_footer_branch
            %309 = sbr.rel target = $region154
          $region159: #{tpu_custom_call.1} parent=151 // loop_exit
            _
        $region152: #{tpu_custom_call.1} parent=23 // pred_fallthru
          _
        // Predicated region
        $region171: #{tpu_custom_call.1} parent=23 // pred_check
          _
        $region172: #{tpu_custom_call.1} parent=23 // pred_check_branch
          %342 = sbr.rel (0) target = $region174
        $region173: #{tpu_custom_call.1} parent=23 // pred_region
          %343 = vsyncadd [#allocation3], 16
        $region174: #{tpu_custom_call.1} parent=23 // pred_fallthru
          _
        %s344 = sadd.s32 %s105, 5
        %s345 = sld [smem:[#allocation5 + %s344]]
        %s346 = scalar_lea.vmem %s1, %s345
        %s347 = scalar_lea.vmem [#allocation2], 5
        %p349 = scmp.lt.u32.totalorder 1, 8
        %p350 = pneg %p349
        // Predicated region
        $region175: #{tpu_custom_call.1} parent=23 // pred_check
          _
        $region176: #{tpu_custom_call.1} parent=23 // pred_check_branch
          %352 = sbr.rel (%p349) target = $region178
        $region177: #{tpu_custom_call.1} parent=23 // pred_region
          %s367 = sand.u32 1, 7
          %p368 = scmp.eq.s32.totalorder %s367, 0
          %p369 = pneg %p368
          // Predicated region
          $region190: #{tpu_custom_call.1} parent=177 // pred_check
            _
          $region191: #{tpu_custom_call.1} parent=177 // pred_check_branch
            %371 = sbr.rel (%p368) target = $region193
          $region192: #{tpu_custom_call.1} parent=177 // pred_region
            %s372 = sand.u32 1, 7
            %s373 = ssub.s32 1, %s372
            %s374 = scalar_lea.vmem %s346, %s373
            %s375 = ssub.s32 1, %s372
            %s376 = scalar_lea.vmem %s347, %s375 [#allocation2]
            %s377 = sshllo.u32 0, %s372
            loop: start=0, step=1, limit=1
            $region194: #{tpu_custom_call.1} parent=192 // loop_pre_header
              _
            $region195: #{tpu_custom_call.1} parent=192 // loop_header
              %s379 = sphi 0, %s383
              %p380 = scmp.ge.s32.totalorder %s379, 1
              %s384 = sphi %s374, %s374
              %s385 = sphi %s376, %s376
            $region196: #{tpu_custom_call.1} parent=192 // loop_header_branch
              %382 = sbr.rel (%p380) target = $region200
            $region197: #{tpu_custom_call.1} parent=192 // loop_body
              %v386 = vld [vmem:[%s384] sm:%s377]
              %387 = vst [vmem:[%s385] sm:%s377] %v386
            $region198: #{tpu_custom_call.1} parent=192 // loop_footer
              %s383 = sadd.s32 1, %s379
            $region199: #{tpu_custom_call.1} parent=192 // loop_footer_branch
              %378 = sbr.rel target = $region195
            $region200: #{tpu_custom_call.1} parent=192 // loop_exit
              _
          $region193: #{tpu_custom_call.1} parent=177 // pred_fallthru
            _
        $region178: #{tpu_custom_call.1} parent=23 // pred_fallthru
          _
        // Predicated region
        $region179: #{tpu_custom_call.1} parent=23 // pred_check
          %p353 = pneg %p349
        $region180: #{tpu_custom_call.1} parent=23 // pred_check_branch
          %355 = sbr.rel (%p353) target = $region182
        $region181: #{tpu_custom_call.1} parent=23 // pred_region
          %s356 = sshllo.u32 0, 1
          loop: start=0, step=1, limit=1
          $region183: #{tpu_custom_call.1} parent=181 // loop_pre_header
            _
          $region184: #{tpu_custom_call.1} parent=181 // loop_header
            %s358 = sphi 0, %s362
            %p359 = scmp.ge.s32.totalorder %s358, 1
            %s363 = sphi %s346, %s346
            %s364 = sphi %s347, %s347
          $region185: #{tpu_custom_call.1} parent=181 // loop_header_branch
            %361 = sbr.rel (%p359) target = $region189
          $region186: #{tpu_custom_call.1} parent=181 // loop_body
            %v365 = vld [vmem:[%s363] sm:%s356]
            %366 = vst [vmem:[%s364] sm:%s356] %v365
          $region187: #{tpu_custom_call.1} parent=181 // loop_footer
            %s362 = sadd.s32 1, %s358
          $region188: #{tpu_custom_call.1} parent=181 // loop_footer_branch
            %357 = sbr.rel target = $region184
          $region189: #{tpu_custom_call.1} parent=181 // loop_exit
            _
        $region182: #{tpu_custom_call.1} parent=23 // pred_fallthru
          _
        // Predicated region
        $region201: #{tpu_custom_call.1} parent=23 // pred_check
          _
        $region202: #{tpu_custom_call.1} parent=23 // pred_check_branch
          %390 = sbr.rel (0) target = $region204
        $region203: #{tpu_custom_call.1} parent=23 // pred_region
          %391 = vsyncadd [#allocation3], 16
        $region204: #{tpu_custom_call.1} parent=23 // pred_fallthru
          _
        %s392 = sadd.s32 %s105, 6
        %s393 = sld [smem:[#allocation5 + %s392]]
        %s394 = scalar_lea.vmem %s1, %s393
        %s395 = scalar_lea.vmem [#allocation2], 6
        %p397 = scmp.lt.u32.totalorder 1, 8
        %p398 = pneg %p397
        // Predicated region
        $region205: #{tpu_custom_call.1} parent=23 // pred_check
          _
        $region206: #{tpu_custom_call.1} parent=23 // pred_check_branch
          %400 = sbr.rel (%p397) target = $region208
        $region207: #{tpu_custom_call.1} parent=23 // pred_region
          %s415 = sand.u32 1, 7
          %p416 = scmp.eq.s32.totalorder %s415, 0
          %p417 = pneg %p416
          // Predicated region
          $region220: #{tpu_custom_call.1} parent=207 // pred_check
            _
          $region221: #{tpu_custom_call.1} parent=207 // pred_check_branch
            %419 = sbr.rel (%p416) target = $region223
          $region222: #{tpu_custom_call.1} parent=207 // pred_region
            %s420 = sand.u32 1, 7
            %s421 = ssub.s32 1, %s420
            %s422 = scalar_lea.vmem %s394, %s421
            %s423 = ssub.s32 1, %s420
            %s424 = scalar_lea.vmem %s395, %s423 [#allocation2]
            %s425 = sshllo.u32 0, %s420
            loop: start=0, step=1, limit=1
            $region224: #{tpu_custom_call.1} parent=222 // loop_pre_header
              _
            $region225: #{tpu_custom_call.1} parent=222 // loop_header
              %s427 = sphi 0, %s431
              %p428 = scmp.ge.s32.totalorder %s427, 1
              %s432 = sphi %s422, %s422
              %s433 = sphi %s424, %s424
            $region226: #{tpu_custom_call.1} parent=222 // loop_header_branch
              %430 = sbr.rel (%p428) target = $region230
            $region227: #{tpu_custom_call.1} parent=222 // loop_body
              %v434 = vld [vmem:[%s432] sm:%s425]
              %435 = vst [vmem:[%s433] sm:%s425] %v434
            $region228: #{tpu_custom_call.1} parent=222 // loop_footer
              %s431 = sadd.s32 1, %s427
            $region229: #{tpu_custom_call.1} parent=222 // loop_footer_branch
              %426 = sbr.rel target = $region225
            $region230: #{tpu_custom_call.1} parent=222 // loop_exit
              _
          $region223: #{tpu_custom_call.1} parent=207 // pred_fallthru
            _
        $region208: #{tpu_custom_call.1} parent=23 // pred_fallthru
          _
        // Predicated region
        $region209: #{tpu_custom_call.1} parent=23 // pred_check
          %p401 = pneg %p397
        $region210: #{tpu_custom_call.1} parent=23 // pred_check_branch
          %403 = sbr.rel (%p401) target = $region212
        $region211: #{tpu_custom_call.1} parent=23 // pred_region
          %s404 = sshllo.u32 0, 1
          loop: start=0, step=1, limit=1
          $region213: #{tpu_custom_call.1} parent=211 // loop_pre_header
            _
          $region214: #{tpu_custom_call.1} parent=211 // loop_header
            %s406 = sphi 0, %s410
            %p407 = scmp.ge.s32.totalorder %s406, 1
            %s411 = sphi %s394, %s394
            %s412 = sphi %s395, %s395
          $region215: #{tpu_custom_call.1} parent=211 // loop_header_branch
            %409 = sbr.rel (%p407) target = $region219
          $region216: #{tpu_custom_call.1} parent=211 // loop_body
            %v413 = vld [vmem:[%s411] sm:%s404]
            %414 = vst [vmem:[%s412] sm:%s404] %v413
          $region217: #{tpu_custom_call.1} parent=211 // loop_footer
            %s410 = sadd.s32 1, %s406
          $region218: #{tpu_custom_call.1} parent=211 // loop_footer_branch
            %405 = sbr.rel target = $region214
          $region219: #{tpu_custom_call.1} parent=211 // loop_exit
            _
        $region212: #{tpu_custom_call.1} parent=23 // pred_fallthru
          _
        // Predicated region
        $region231: #{tpu_custom_call.1} parent=23 // pred_check
          _
        $region232: #{tpu_custom_call.1} parent=23 // pred_check_branch
          %438 = sbr.rel (0) target = $region234
        $region233: #{tpu_custom_call.1} parent=23 // pred_region
          %439 = vsyncadd [#allocation3], 16
        $region234: #{tpu_custom_call.1} parent=23 // pred_fallthru
          _
        %s440 = sadd.s32 %s105, 7
        %s441 = sld [smem:[#allocation5 + %s440]]
        %s442 = scalar_lea.vmem %s1, %s441
        %s443 = scalar_lea.vmem [#allocation2], 7
        %p445 = scmp.lt.u32.totalorder 1, 8
        %p446 = pneg %p445
        // Predicated region
        $region235: #{tpu_custom_call.1} parent=23 // pred_check
          _
        $region236: #{tpu_custom_call.1} parent=23 // pred_check_branch
          %448 = sbr.rel (%p445) target = $region238
        $region237: #{tpu_custom_call.1} parent=23 // pred_region
          %s463 = sand.u32 1, 7
          %p464 = scmp.eq.s32.totalorder %s463, 0
          %p465 = pneg %p464
          // Predicated region
          $region250: #{tpu_custom_call.1} parent=237 // pred_check
            _
          $region251: #{tpu_custom_call.1} parent=237 // pred_check_branch
            %467 = sbr.rel (%p464) target = $region253
          $region252: #{tpu_custom_call.1} parent=237 // pred_region
            %s468 = sand.u32 1, 7
            %s469 = ssub.s32 1, %s468
            %s470 = scalar_lea.vmem %s442, %s469
            %s471 = ssub.s32 1, %s468
            %s472 = scalar_lea.vmem %s443, %s471 [#allocation2]
            %s473 = sshllo.u32 0, %s468
            loop: start=0, step=1, limit=1
            $region254: #{tpu_custom_call.1} parent=252 // loop_pre_header
              _
            $region255: #{tpu_custom_call.1} parent=252 // loop_header
              %s475 = sphi 0, %s479
              %p476 = scmp.ge.s32.totalorder %s475, 1
              %s480 = sphi %s470, %s470
              %s481 = sphi %s472, %s472
            $region256: #{tpu_custom_call.1} parent=252 // loop_header_branch
              %478 = sbr.rel (%p476) target = $region260
            $region257: #{tpu_custom_call.1} parent=252 // loop_body
              %v482 = vld [vmem:[%s480] sm:%s473]
              %483 = vst [vmem:[%s481] sm:%s473] %v482
            $region258: #{tpu_custom_call.1} parent=252 // loop_footer
              %s479 = sadd.s32 1, %s475
            $region259: #{tpu_custom_call.1} parent=252 // loop_footer_branch
              %474 = sbr.rel target = $region255
            $region260: #{tpu_custom_call.1} parent=252 // loop_exit
              _
          $region253: #{tpu_custom_call.1} parent=237 // pred_fallthru
            _
        $region238: #{tpu_custom_call.1} parent=23 // pred_fallthru
          _
        // Predicated region
        $region239: #{tpu_custom_call.1} parent=23 // pred_check
          %p449 = pneg %p445
        $region240: #{tpu_custom_call.1} parent=23 // pred_check_branch
          %451 = sbr.rel (%p449) target = $region242
        $region241: #{tpu_custom_call.1} parent=23 // pred_region
          %s452 = sshllo.u32 0, 1
          loop: start=0, step=1, limit=1
          $region243: #{tpu_custom_call.1} parent=241 // loop_pre_header
            _
          $region244: #{tpu_custom_call.1} parent=241 // loop_header
            %s454 = sphi 0, %s458
            %p455 = scmp.ge.s32.totalorder %s454, 1
            %s459 = sphi %s442, %s442
            %s460 = sphi %s443, %s443
          $region245: #{tpu_custom_call.1} parent=241 // loop_header_branch
            %457 = sbr.rel (%p455) target = $region249
          $region246: #{tpu_custom_call.1} parent=241 // loop_body
            %v461 = vld [vmem:[%s459] sm:%s452]
            %462 = vst [vmem:[%s460] sm:%s452] %v461
          $region247: #{tpu_custom_call.1} parent=241 // loop_footer
            %s458 = sadd.s32 1, %s454
          $region248: #{tpu_custom_call.1} parent=241 // loop_footer_branch
            %453 = sbr.rel target = $region244
          $region249: #{tpu_custom_call.1} parent=241 // loop_exit
            _
        $region242: #{tpu_custom_call.1} parent=23 // pred_fallthru
          _
        // Predicated region
        $region261: #{tpu_custom_call.1} parent=23 // pred_check
          _
        $region262: #{tpu_custom_call.1} parent=23 // pred_check_branch
          %486 = sbr.rel (0) target = $region264
        $region263: #{tpu_custom_call.1} parent=23 // pred_region
          %487 = vsyncadd [#allocation3], 16
        $region264: #{tpu_custom_call.1} parent=23 // pred_fallthru
          _
        %s488 = sadd.s32 %s105, 8
        %s489 = sld [smem:[#allocation5 + %s488]]
        %s490 = scalar_lea.vmem %s1, %s489
        %s491 = scalar_lea.vmem [#allocation2], 8
        %s492 = scalar_lea.sflag [#allocation3], 1
        %p494 = scmp.lt.u32.totalorder 1, 8
        %p495 = pneg %p494
        // Predicated region
        $region265: #{tpu_custom_call.1} parent=23 // pred_check
          _
        $region266: #{tpu_custom_call.1} parent=23 // pred_check_branch
          %497 = sbr.rel (%p494) target = $region268
        $region267: #{tpu_custom_call.1} parent=23 // pred_region
          %s512 = sand.u32 1, 7
          %p513 = scmp.eq.s32.totalorder %s512, 0
          %p514 = pneg %p513
          // Predicated region
          $region280: #{tpu_custom_call.1} parent=267 // pred_check
            _
          $region281: #{tpu_custom_call.1} parent=267 // pred_check_branch
            %516 = sbr.rel (%p513) target = $region283
          $region282: #{tpu_custom_call.1} parent=267 // pred_region
            %s517 = sand.u32 1, 7
            %s518 = ssub.s32 1, %s517
            %s519 = scalar_lea.vmem %s490, %s518
            %s520 = ssub.s32 1, %s517
            %s521 = scalar_lea.vmem %s491, %s520 [#allocation2]
            %s522 = sshllo.u32 0, %s517
            loop: start=0, step=1, limit=1
            $region284: #{tpu_custom_call.1} parent=282 // loop_pre_header
              _
            $region285: #{tpu_custom_call.1} parent=282 // loop_header
              %s524 = sphi 0, %s528
              %p525 = scmp.ge.s32.totalorder %s524, 1
              %s529 = sphi %s519, %s519
              %s530 = sphi %s521, %s521
            $region286: #{tpu_custom_call.1} parent=282 // loop_header_branch
              %527 = sbr.rel (%p525) target = $region290
            $region287: #{tpu_custom_call.1} parent=282 // loop_body
              %v531 = vld [vmem:[%s529] sm:%s522]
              %532 = vst [vmem:[%s530] sm:%s522] %v531
            $region288: #{tpu_custom_call.1} parent=282 // loop_footer
              %s528 = sadd.s32 1, %s524
            $region289: #{tpu_custom_call.1} parent=282 // loop_footer_branch
              %523 = sbr.rel target = $region285
            $region290: #{tpu_custom_call.1} parent=282 // loop_exit
              _
          $region283: #{tpu_custom_call.1} parent=267 // pred_fallthru
            _
        $region268: #{tpu_custom_call.1} parent=23 // pred_fallthru
          _
        // Predicated region
        $region269: #{tpu_custom_call.1} parent=23 // pred_check
          %p498 = pneg %p494
        $region270: #{tpu_custom_call.1} parent=23 // pred_check_branch
          %500 = sbr.rel (%p498) target = $region272
        $region271: #{tpu_custom_call.1} parent=23 // pred_region
          %s501 = sshllo.u32 0, 1
          loop: start=0, step=1, limit=1
          $region273: #{tpu_custom_call.1} parent=271 // loop_pre_header
            _
          $region274: #{tpu_custom_call.1} parent=271 // loop_header
            %s503 = sphi 0, %s507
            %p504 = scmp.ge.s32.totalorder %s503, 1
            %s508 = sphi %s490, %s490
            %s509 = sphi %s491, %s491
          $region275: #{tpu_custom_call.1} parent=271 // loop_header_branch
            %506 = sbr.rel (%p504) target = $region279
          $region276: #{tpu_custom_call.1} parent=271 // loop_body
            %v510 = vld [vmem:[%s508] sm:%s501]
            %511 = vst [vmem:[%s509] sm:%s501] %v510
          $region277: #{tpu_custom_call.1} parent=271 // loop_footer
            %s507 = sadd.s32 1, %s503
          $region278: #{tpu_custom_call.1} parent=271 // loop_footer_branch
            %502 = sbr.rel target = $region274
          $region279: #{tpu_custom_call.1} parent=271 // loop_exit
            _
        $region272: #{tpu_custom_call.1} parent=23 // pred_fallthru
          _
        // Predicated region
        $region291: #{tpu_custom_call.1} parent=23 // pred_check
          _
        $region292: #{tpu_custom_call.1} parent=23 // pred_check_branch
          %535 = sbr.rel (0) target = $region294
        $region293: #{tpu_custom_call.1} parent=23 // pred_region
          %536 = vsyncadd %s492, 16
        $region294: #{tpu_custom_call.1} parent=23 // pred_fallthru
          _
        %s537 = sadd.s32 %s105, 9
        %s538 = sld [smem:[#allocation5 + %s537]]
        %s539 = scalar_lea.vmem %s1, %s538
        %s540 = scalar_lea.vmem [#allocation2], 9
        %p542 = scmp.lt.u32.totalorder 1, 8
        %p543 = pneg %p542
        // Predicated region
        $region295: #{tpu_custom_call.1} parent=23 // pred_check
          _
        $region296: #{tpu_custom_call.1} parent=23 // pred_check_branch
          %545 = sbr.rel (%p542) target = $region298
        $region297: #{tpu_custom_call.1} parent=23 // pred_region
          %s560 = sand.u32 1, 7
          %p561 = scmp.eq.s32.totalorder %s560, 0
          %p562 = pneg %p561
          // Predicated region
          $region310: #{tpu_custom_call.1} parent=297 // pred_check
            _
          $region311: #{tpu_custom_call.1} parent=297 // pred_check_branch
            %564 = sbr.rel (%p561) target = $region313
          $region312: #{tpu_custom_call.1} parent=297 // pred_region
            %s565 = sand.u32 1, 7
            %s566 = ssub.s32 1, %s565
            %s567 = scalar_lea.vmem %s539, %s566
            %s568 = ssub.s32 1, %s565
            %s569 = scalar_lea.vmem %s540, %s568 [#allocation2]
            %s570 = sshllo.u32 0, %s565
            loop: start=0, step=1, limit=1
            $region314: #{tpu_custom_call.1} parent=312 // loop_pre_header
              _
            $region315: #{tpu_custom_call.1} parent=312 // loop_header
              %s572 = sphi 0, %s576
              %p573 = scmp.ge.s32.totalorder %s572, 1
              %s577 = sphi %s567, %s567
              %s578 = sphi %s569, %s569
            $region316: #{tpu_custom_call.1} parent=312 // loop_header_branch
              %575 = sbr.rel (%p573) target = $region320
            $region317: #{tpu_custom_call.1} parent=312 // loop_body
              %v579 = vld [vmem:[%s577] sm:%s570]
              %580 = vst [vmem:[%s578] sm:%s570] %v579
            $region318: #{tpu_custom_call.1} parent=312 // loop_footer
              %s576 = sadd.s32 1, %s572
            $region319: #{tpu_custom_call.1} parent=312 // loop_footer_branch
              %571 = sbr.rel target = $region315
            $region320: #{tpu_custom_call.1} parent=312 // loop_exit
              _
          $region313: #{tpu_custom_call.1} parent=297 // pred_fallthru
            _
        $region298: #{tpu_custom_call.1} parent=23 // pred_fallthru
          _
        // Predicated region
        $region299: #{tpu_custom_call.1} parent=23 // pred_check
          %p546 = pneg %p542
        $region300: #{tpu_custom_call.1} parent=23 // pred_check_branch
          %548 = sbr.rel (%p546) target = $region302
        $region301: #{tpu_custom_call.1} parent=23 // pred_region
          %s549 = sshllo.u32 0, 1
          loop: start=0, step=1, limit=1
          $region303: #{tpu_custom_call.1} parent=301 // loop_pre_header
            _
          $region304: #{tpu_custom_call.1} parent=301 // loop_header
            %s551 = sphi 0, %s555
            %p552 = scmp.ge.s32.totalorder %s551, 1
            %s556 = sphi %s539, %s539
            %s557 = sphi %s540, %s540
          $region305: #{tpu_custom_call.1} parent=301 // loop_header_branch
            %554 = sbr.rel (%p552) target = $region309
          $region306: #{tpu_custom_call.1} parent=301 // loop_body
            %v558 = vld [vmem:[%s556] sm:%s549]
            %559 = vst [vmem:[%s557] sm:%s549] %v558
          $region307: #{tpu_custom_call.1} parent=301 // loop_footer
            %s555 = sadd.s32 1, %s551
          $region308: #{tpu_custom_call.1} parent=301 // loop_footer_branch
            %550 = sbr.rel target = $region304
          $region309: #{tpu_custom_call.1} parent=301 // loop_exit
            _
        $region302: #{tpu_custom_call.1} parent=23 // pred_fallthru
          _
        // Predicated region
        $region321: #{tpu_custom_call.1} parent=23 // pred_check
          _
        $region322: #{tpu_custom_call.1} parent=23 // pred_check_branch
          %583 = sbr.rel (0) target = $region324
        $region323: #{tpu_custom_call.1} parent=23 // pred_region
          %584 = vsyncadd %s492, 16
        $region324: #{tpu_custom_call.1} parent=23 // pred_fallthru
          _
        %s585 = sadd.s32 %s105, 10
        %s586 = sld [smem:[#allocation5 + %s585]]
        %s587 = scalar_lea.vmem %s1, %s586
        %s588 = scalar_lea.vmem [#allocation2], 10
        %p590 = scmp.lt.u32.totalorder 1, 8
        %p591 = pneg %p590
        // Predicated region
        $region325: #{tpu_custom_call.1} parent=23 // pred_check
          _
        $region326: #{tpu_custom_call.1} parent=23 // pred_check_branch
          %593 = sbr.rel (%p590) target = $region328
        $region327: #{tpu_custom_call.1} parent=23 // pred_region
          %s608 = sand.u32 1, 7
          %p609 = scmp.eq.s32.totalorder %s608, 0
          %p610 = pneg %p609
          // Predicated region
          $region340: #{tpu_custom_call.1} parent=327 // pred_check
            _
          $region341: #{tpu_custom_call.1} parent=327 // pred_check_branch
            %612 = sbr.rel (%p609) target = $region343
          $region342: #{tpu_custom_call.1} parent=327 // pred_region
            %s613 = sand.u32 1, 7
            %s614 = ssub.s32 1, %s613
            %s615 = scalar_lea.vmem %s587, %s614
            %s616 = ssub.s32 1, %s613
            %s617 = scalar_lea.vmem %s588, %s616 [#allocation2]
            %s618 = sshllo.u32 0, %s613
            loop: start=0, step=1, limit=1
            $region344: #{tpu_custom_call.1} parent=342 // loop_pre_header
              _
            $region345: #{tpu_custom_call.1} parent=342 // loop_header
              %s620 = sphi 0, %s624
              %p621 = scmp.ge.s32.totalorder %s620, 1
              %s625 = sphi %s615, %s615
              %s626 = sphi %s617, %s617
            $region346: #{tpu_custom_call.1} parent=342 // loop_header_branch
              %623 = sbr.rel (%p621) target = $region350
            $region347: #{tpu_custom_call.1} parent=342 // loop_body
              %v627 = vld [vmem:[%s625] sm:%s618]
              %628 = vst [vmem:[%s626] sm:%s618] %v627
            $region348: #{tpu_custom_call.1} parent=342 // loop_footer
              %s624 = sadd.s32 1, %s620
            $region349: #{tpu_custom_call.1} parent=342 // loop_footer_branch
              %619 = sbr.rel target = $region345
            $region350: #{tpu_custom_call.1} parent=342 // loop_exit
              _
          $region343: #{tpu_custom_call.1} parent=327 // pred_fallthru
            _
        $region328: #{tpu_custom_call.1} parent=23 // pred_fallthru
          _
        // Predicated region
        $region329: #{tpu_custom_call.1} parent=23 // pred_check
          %p594 = pneg %p590
        $region330: #{tpu_custom_call.1} parent=23 // pred_check_branch
          %596 = sbr.rel (%p594) target = $region332
        $region331: #{tpu_custom_call.1} parent=23 // pred_region
          %s597 = sshllo.u32 0, 1
          loop: start=0, step=1, limit=1
          $region333: #{tpu_custom_call.1} parent=331 // loop_pre_header
            _
          $region334: #{tpu_custom_call.1} parent=331 // loop_header
            %s599 = sphi 0, %s603
            %p600 = scmp.ge.s32.totalorder %s599, 1
            %s604 = sphi %s587, %s587
            %s605 = sphi %s588, %s588
          $region335: #{tpu_custom_call.1} parent=331 // loop_header_branch
            %602 = sbr.rel (%p600) target = $region339
          $region336: #{tpu_custom_call.1} parent=331 // loop_body
            %v606 = vld [vmem:[%s604] sm:%s597]
            %607 = vst [vmem:[%s605] sm:%s597] %v606
          $region337: #{tpu_custom_call.1} parent=331 // loop_footer
            %s603 = sadd.s32 1, %s599
          $region338: #{tpu_custom_call.1} parent=331 // loop_footer_branch
            %598 = sbr.rel target = $region334
          $region339: #{tpu_custom_call.1} parent=331 // loop_exit
            _
        $region332: #{tpu_custom_call.1} parent=23 // pred_fallthru
          _
        // Predicated region
        $region351: #{tpu_custom_call.1} parent=23 // pred_check
          _
        $region352: #{tpu_custom_call.1} parent=23 // pred_check_branch
          %631 = sbr.rel (0) target = $region354
        $region353: #{tpu_custom_call.1} parent=23 // pred_region
          %632 = vsyncadd %s492, 16
        $region354: #{tpu_custom_call.1} parent=23 // pred_fallthru
          _
        %s633 = sadd.s32 %s105, 11
        %s634 = sld [smem:[#allocation5 + %s633]]
        %s635 = scalar_lea.vmem %s1, %s634
        %s636 = scalar_lea.vmem [#allocation2], 11
        %p638 = scmp.lt.u32.totalorder 1, 8
        %p639 = pneg %p638
        // Predicated region
        $region355: #{tpu_custom_call.1} parent=23 // pred_check
          _
        $region356: #{tpu_custom_call.1} parent=23 // pred_check_branch
          %641 = sbr.rel (%p638) target = $region358
        $region357: #{tpu_custom_call.1} parent=23 // pred_region
          %s656 = sand.u32 1, 7
          %p657 = scmp.eq.s32.totalorder %s656, 0
          %p658 = pneg %p657
          // Predicated region
          $region370: #{tpu_custom_call.1} parent=357 // pred_check
            _
          $region371: #{tpu_custom_call.1} parent=357 // pred_check_branch
            %660 = sbr.rel (%p657) target = $region373
          $region372: #{tpu_custom_call.1} parent=357 // pred_region
            %s661 = sand.u32 1, 7
            %s662 = ssub.s32 1, %s661
            %s663 = scalar_lea.vmem %s635, %s662
            %s664 = ssub.s32 1, %s661
            %s665 = scalar_lea.vmem %s636, %s664 [#allocation2]
            %s666 = sshllo.u32 0, %s661
            loop: start=0, step=1, limit=1
            $region374: #{tpu_custom_call.1} parent=372 // loop_pre_header
              _
            $region375: #{tpu_custom_call.1} parent=372 // loop_header
              %s668 = sphi 0, %s672
              %p669 = scmp.ge.s32.totalorder %s668, 1
              %s673 = sphi %s663, %s663
              %s674 = sphi %s665, %s665
            $region376: #{tpu_custom_call.1} parent=372 // loop_header_branch
              %671 = sbr.rel (%p669) target = $region380
            $region377: #{tpu_custom_call.1} parent=372 // loop_body
              %v675 = vld [vmem:[%s673] sm:%s666]
              %676 = vst [vmem:[%s674] sm:%s666] %v675
            $region378: #{tpu_custom_call.1} parent=372 // loop_footer
              %s672 = sadd.s32 1, %s668
            $region379: #{tpu_custom_call.1} parent=372 // loop_footer_branch
              %667 = sbr.rel target = $region375
            $region380: #{tpu_custom_call.1} parent=372 // loop_exit
              _
          $region373: #{tpu_custom_call.1} parent=357 // pred_fallthru
            _
        $region358: #{tpu_custom_call.1} parent=23 // pred_fallthru
          _
        // Predicated region
        $region359: #{tpu_custom_call.1} parent=23 // pred_check
          %p642 = pneg %p638
        $region360: #{tpu_custom_call.1} parent=23 // pred_check_branch
          %644 = sbr.rel (%p642) target = $region362
        $region361: #{tpu_custom_call.1} parent=23 // pred_region
          %s645 = sshllo.u32 0, 1
          loop: start=0, step=1, limit=1
          $region363: #{tpu_custom_call.1} parent=361 // loop_pre_header
            _
          $region364: #{tpu_custom_call.1} parent=361 // loop_header
            %s647 = sphi 0, %s651
            %p648 = scmp.ge.s32.totalorder %s647, 1
            %s652 = sphi %s635, %s635
            %s653 = sphi %s636, %s636
          $region365: #{tpu_custom_call.1} parent=361 // loop_header_branch
            %650 = sbr.rel (%p648) target = $region369
          $region366: #{tpu_custom_call.1} parent=361 // loop_body
            %v654 = vld [vmem:[%s652] sm:%s645]
            %655 = vst [vmem:[%s653] sm:%s645] %v654
          $region367: #{tpu_custom_call.1} parent=361 // loop_footer
            %s651 = sadd.s32 1, %s647
          $region368: #{tpu_custom_call.1} parent=361 // loop_footer_branch
            %646 = sbr.rel target = $region364
          $region369: #{tpu_custom_call.1} parent=361 // loop_exit
            _
        $region362: #{tpu_custom_call.1} parent=23 // pred_fallthru
          _
        // Predicated region
        $region381: #{tpu_custom_call.1} parent=23 // pred_check
          _
        $region382: #{tpu_custom_call.1} parent=23 // pred_check_branch
          %679 = sbr.rel (0) target = $region384
        $region383: #{tpu_custom_call.1} parent=23 // pred_region
          %680 = vsyncadd %s492, 16
        $region384: #{tpu_custom_call.1} parent=23 // pred_fallthru
          _
        %s681 = sadd.s32 %s105, 12
        %s682 = sld [smem:[#allocation5 + %s681]]
        %s683 = scalar_lea.vmem %s1, %s682
        %s684 = scalar_lea.vmem [#allocation2], 12
        %p686 = scmp.lt.u32.totalorder 1, 8
        %p687 = pneg %p686
        // Predicated region
        $region385: #{tpu_custom_call.1} parent=23 // pred_check
          _
        $region386: #{tpu_custom_call.1} parent=23 // pred_check_branch
          %689 = sbr.rel (%p686) target = $region388
        $region387: #{tpu_custom_call.1} parent=23 // pred_region
          %s704 = sand.u32 1, 7
          %p705 = scmp.eq.s32.totalorder %s704, 0
          %p706 = pneg %p705
          // Predicated region
          $region400: #{tpu_custom_call.1} parent=387 // pred_check
            _
          $region401: #{tpu_custom_call.1} parent=387 // pred_check_branch
            %708 = sbr.rel (%p705) target = $region403
          $region402: #{tpu_custom_call.1} parent=387 // pred_region
            %s709 = sand.u32 1, 7
            %s710 = ssub.s32 1, %s709
            %s711 = scalar_lea.vmem %s683, %s710
            %s712 = ssub.s32 1, %s709
            %s713 = scalar_lea.vmem %s684, %s712 [#allocation2]
            %s714 = sshllo.u32 0, %s709
            loop: start=0, step=1, limit=1
            $region404: #{tpu_custom_call.1} parent=402 // loop_pre_header
              _
            $region405: #{tpu_custom_call.1} parent=402 // loop_header
              %s716 = sphi 0, %s720
              %p717 = scmp.ge.s32.totalorder %s716, 1
              %s721 = sphi %s711, %s711
              %s722 = sphi %s713, %s713
            $region406: #{tpu_custom_call.1} parent=402 // loop_header_branch
              %719 = sbr.rel (%p717) target = $region410
            $region407: #{tpu_custom_call.1} parent=402 // loop_body
              %v723 = vld [vmem:[%s721] sm:%s714]
              %724 = vst [vmem:[%s722] sm:%s714] %v723
            $region408: #{tpu_custom_call.1} parent=402 // loop_footer
              %s720 = sadd.s32 1, %s716
            $region409: #{tpu_custom_call.1} parent=402 // loop_footer_branch
              %715 = sbr.rel target = $region405
            $region410: #{tpu_custom_call.1} parent=402 // loop_exit
              _
          $region403: #{tpu_custom_call.1} parent=387 // pred_fallthru
            _
        $region388: #{tpu_custom_call.1} parent=23 // pred_fallthru
          _
        // Predicated region
        $region389: #{tpu_custom_call.1} parent=23 // pred_check
          %p690 = pneg %p686
        $region390: #{tpu_custom_call.1} parent=23 // pred_check_branch
          %692 = sbr.rel (%p690) target = $region392
        $region391: #{tpu_custom_call.1} parent=23 // pred_region
          %s693 = sshllo.u32 0, 1
          loop: start=0, step=1, limit=1
          $region393: #{tpu_custom_call.1} parent=391 // loop_pre_header
            _
          $region394: #{tpu_custom_call.1} parent=391 // loop_header
            %s695 = sphi 0, %s699
            %p696 = scmp.ge.s32.totalorder %s695, 1
            %s700 = sphi %s683, %s683
            %s701 = sphi %s684, %s684
          $region395: #{tpu_custom_call.1} parent=391 // loop_header_branch
            %698 = sbr.rel (%p696) target = $region399
          $region396: #{tpu_custom_call.1} parent=391 // loop_body
            %v702 = vld [vmem:[%s700] sm:%s693]
            %703 = vst [vmem:[%s701] sm:%s693] %v702
          $region397: #{tpu_custom_call.1} parent=391 // loop_footer
            %s699 = sadd.s32 1, %s695
          $region398: #{tpu_custom_call.1} parent=391 // loop_footer_branch
            %694 = sbr.rel target = $region394
          $region399: #{tpu_custom_call.1} parent=391 // loop_exit
            _
        $region392: #{tpu_custom_call.1} parent=23 // pred_fallthru
          _
        // Predicated region
        $region411: #{tpu_custom_call.1} parent=23 // pred_check
          _
        $region412: #{tpu_custom_call.1} parent=23 // pred_check_branch
          %727 = sbr.rel (0) target = $region414
        $region413: #{tpu_custom_call.1} parent=23 // pred_region
          %728 = vsyncadd %s492, 16
        $region414: #{tpu_custom_call.1} parent=23 // pred_fallthru
          _
        %s729 = sadd.s32 %s105, 13
        %s730 = sld [smem:[#allocation5 + %s729]]
        %s731 = scalar_lea.vmem %s1, %s730
        %s732 = scalar_lea.vmem [#allocation2], 13
        %p734 = scmp.lt.u32.totalorder 1, 8
        %p735 = pneg %p734
        // Predicated region
        $region415: #{tpu_custom_call.1} parent=23 // pred_check
          _
        $region416: #{tpu_custom_call.1} parent=23 // pred_check_branch
          %737 = sbr.rel (%p734) target = $region418
        $region417: #{tpu_custom_call.1} parent=23 // pred_region
          %s752 = sand.u32 1, 7
          %p753 = scmp.eq.s32.totalorder %s752, 0
          %p754 = pneg %p753
          // Predicated region
          $region430: #{tpu_custom_call.1} parent=417 // pred_check
            _
          $region431: #{tpu_custom_call.1} parent=417 // pred_check_branch
            %756 = sbr.rel (%p753) target = $region433
          $region432: #{tpu_custom_call.1} parent=417 // pred_region
            %s757 = sand.u32 1, 7
            %s758 = ssub.s32 1, %s757
            %s759 = scalar_lea.vmem %s731, %s758
            %s760 = ssub.s32 1, %s757
            %s761 = scalar_lea.vmem %s732, %s760 [#allocation2]
            %s762 = sshllo.u32 0, %s757
            loop: start=0, step=1, limit=1
            $region434: #{tpu_custom_call.1} parent=432 // loop_pre_header
              _
            $region435: #{tpu_custom_call.1} parent=432 // loop_header
              %s764 = sphi 0, %s768
              %p765 = scmp.ge.s32.totalorder %s764, 1
              %s769 = sphi %s759, %s759
              %s770 = sphi %s761, %s761
            $region436: #{tpu_custom_call.1} parent=432 // loop_header_branch
              %767 = sbr.rel (%p765) target = $region440
            $region437: #{tpu_custom_call.1} parent=432 // loop_body
              %v771 = vld [vmem:[%s769] sm:%s762]
              %772 = vst [vmem:[%s770] sm:%s762] %v771
            $region438: #{tpu_custom_call.1} parent=432 // loop_footer
              %s768 = sadd.s32 1, %s764
            $region439: #{tpu_custom_call.1} parent=432 // loop_footer_branch
              %763 = sbr.rel target = $region435
            $region440: #{tpu_custom_call.1} parent=432 // loop_exit
              _
          $region433: #{tpu_custom_call.1} parent=417 // pred_fallthru
            _
        $region418: #{tpu_custom_call.1} parent=23 // pred_fallthru
          _
        // Predicated region
        $region419: #{tpu_custom_call.1} parent=23 // pred_check
          %p738 = pneg %p734
        $region420: #{tpu_custom_call.1} parent=23 // pred_check_branch
          %740 = sbr.rel (%p738) target = $region422
        $region421: #{tpu_custom_call.1} parent=23 // pred_region
          %s741 = sshllo.u32 0, 1
          loop: start=0, step=1, limit=1
          $region423: #{tpu_custom_call.1} parent=421 // loop_pre_header
            _
          $region424: #{tpu_custom_call.1} parent=421 // loop_header
            %s743 = sphi 0, %s747
            %p744 = scmp.ge.s32.totalorder %s743, 1
            %s748 = sphi %s731, %s731
            %s749 = sphi %s732, %s732
          $region425: #{tpu_custom_call.1} parent=421 // loop_header_branch
            %746 = sbr.rel (%p744) target = $region429
          $region426: #{tpu_custom_call.1} parent=421 // loop_body
            %v750 = vld [vmem:[%s748] sm:%s741]
            %751 = vst [vmem:[%s749] sm:%s741] %v750
          $region427: #{tpu_custom_call.1} parent=421 // loop_footer
            %s747 = sadd.s32 1, %s743
          $region428: #{tpu_custom_call.1} parent=421 // loop_footer_branch
            %742 = sbr.rel target = $region424
          $region429: #{tpu_custom_call.1} parent=421 // loop_exit
            _
        $region422: #{tpu_custom_call.1} parent=23 // pred_fallthru
          _
        // Predicated region
        $region441: #{tpu_custom_call.1} parent=23 // pred_check
          _
        $region442: #{tpu_custom_call.1} parent=23 // pred_check_branch
          %775 = sbr.rel (0) target = $region444
        $region443: #{tpu_custom_call.1} parent=23 // pred_region
          %776 = vsyncadd %s492, 16
        $region444: #{tpu_custom_call.1} parent=23 // pred_fallthru
          _
        %s777 = sadd.s32 %s105, 14
        %s778 = sld [smem:[#allocation5 + %s777]]
        %s779 = scalar_lea.vmem %s1, %s778
        %s780 = scalar_lea.vmem [#allocation2], 14
        %p782 = scmp.lt.u32.totalorder 1, 8
        %p783 = pneg %p782
        // Predicated region
        $region445: #{tpu_custom_call.1} parent=23 // pred_check
          _
        $region446: #{tpu_custom_call.1} parent=23 // pred_check_branch
          %785 = sbr.rel (%p782) target = $region448
        $region447: #{tpu_custom_call.1} parent=23 // pred_region
          %s800 = sand.u32 1, 7
          %p801 = scmp.eq.s32.totalorder %s800, 0
          %p802 = pneg %p801
          // Predicated region
          $region460: #{tpu_custom_call.1} parent=447 // pred_check
            _
          $region461: #{tpu_custom_call.1} parent=447 // pred_check_branch
            %804 = sbr.rel (%p801) target = $region463
          $region462: #{tpu_custom_call.1} parent=447 // pred_region
            %s805 = sand.u32 1, 7
            %s806 = ssub.s32 1, %s805
            %s807 = scalar_lea.vmem %s779, %s806
            %s808 = ssub.s32 1, %s805
            %s809 = scalar_lea.vmem %s780, %s808 [#allocation2]
            %s810 = sshllo.u32 0, %s805
            loop: start=0, step=1, limit=1
            $region464: #{tpu_custom_call.1} parent=462 // loop_pre_header
              _
            $region465: #{tpu_custom_call.1} parent=462 // loop_header
              %s812 = sphi 0, %s816
              %p813 = scmp.ge.s32.totalorder %s812, 1
              %s817 = sphi %s807, %s807
              %s818 = sphi %s809, %s809
            $region466: #{tpu_custom_call.1} parent=462 // loop_header_branch
              %815 = sbr.rel (%p813) target = $region470
            $region467: #{tpu_custom_call.1} parent=462 // loop_body
              %v819 = vld [vmem:[%s817] sm:%s810]
              %820 = vst [vmem:[%s818] sm:%s810] %v819
            $region468: #{tpu_custom_call.1} parent=462 // loop_footer
              %s816 = sadd.s32 1, %s812
            $region469: #{tpu_custom_call.1} parent=462 // loop_footer_branch
              %811 = sbr.rel target = $region465
            $region470: #{tpu_custom_call.1} parent=462 // loop_exit
              _
          $region463: #{tpu_custom_call.1} parent=447 // pred_fallthru
            _
        $region448: #{tpu_custom_call.1} parent=23 // pred_fallthru
          _
        // Predicated region
        $region449: #{tpu_custom_call.1} parent=23 // pred_check
          %p786 = pneg %p782
        $region450: #{tpu_custom_call.1} parent=23 // pred_check_branch
          %788 = sbr.rel (%p786) target = $region452
        $region451: #{tpu_custom_call.1} parent=23 // pred_region
          %s789 = sshllo.u32 0, 1
          loop: start=0, step=1, limit=1
          $region453: #{tpu_custom_call.1} parent=451 // loop_pre_header
            _
          $region454: #{tpu_custom_call.1} parent=451 // loop_header
            %s791 = sphi 0, %s795
            %p792 = scmp.ge.s32.totalorder %s791, 1
            %s796 = sphi %s779, %s779
            %s797 = sphi %s780, %s780
          $region455: #{tpu_custom_call.1} parent=451 // loop_header_branch
            %794 = sbr.rel (%p792) target = $region459
          $region456: #{tpu_custom_call.1} parent=451 // loop_body
            %v798 = vld [vmem:[%s796] sm:%s789]
            %799 = vst [vmem:[%s797] sm:%s789] %v798
          $region457: #{tpu_custom_call.1} parent=451 // loop_footer
            %s795 = sadd.s32 1, %s791
          $region458: #{tpu_custom_call.1} parent=451 // loop_footer_branch
            %790 = sbr.rel target = $region454
          $region459: #{tpu_custom_call.1} parent=451 // loop_exit
            _
        $region452: #{tpu_custom_call.1} parent=23 // pred_fallthru
          _
        // Predicated region
        $region471: #{tpu_custom_call.1} parent=23 // pred_check
          _
        $region472: #{tpu_custom_call.1} parent=23 // pred_check_branch
          %823 = sbr.rel (0) target = $region474
        $region473: #{tpu_custom_call.1} parent=23 // pred_region
          %824 = vsyncadd %s492, 16
        $region474: #{tpu_custom_call.1} parent=23 // pred_fallthru
          _
        %s825 = sadd.s32 %s105, 15
        %s826 = sld [smem:[#allocation5 + %s825]]
        %s827 = scalar_lea.vmem %s1, %s826
        %s828 = scalar_lea.vmem [#allocation2], 15
        %p830 = scmp.lt.u32.totalorder 1, 8
        %p831 = pneg %p830
        // Predicated region
        $region475: #{tpu_custom_call.1} parent=23 // pred_check
          _
        $region476: #{tpu_custom_call.1} parent=23 // pred_check_branch
          %833 = sbr.rel (%p830) target = $region478
        $region477: #{tpu_custom_call.1} parent=23 // pred_region
          %s848 = sand.u32 1, 7
          %p849 = scmp.eq.s32.totalorder %s848, 0
          %p850 = pneg %p849
          // Predicated region
          $region490: #{tpu_custom_call.1} parent=477 // pred_check
            _
          $region491: #{tpu_custom_call.1} parent=477 // pred_check_branch
            %852 = sbr.rel (%p849) target = $region493
          $region492: #{tpu_custom_call.1} parent=477 // pred_region
            %s853 = sand.u32 1, 7
            %s854 = ssub.s32 1, %s853
            %s855 = scalar_lea.vmem %s827, %s854
            %s856 = ssub.s32 1, %s853
            %s857 = scalar_lea.vmem %s828, %s856 [#allocation2]
            %s858 = sshllo.u32 0, %s853
            loop: start=0, step=1, limit=1
            $region494: #{tpu_custom_call.1} parent=492 // loop_pre_header
              _
            $region495: #{tpu_custom_call.1} parent=492 // loop_header
              %s860 = sphi 0, %s864
              %p861 = scmp.ge.s32.totalorder %s860, 1
              %s865 = sphi %s855, %s855
              %s866 = sphi %s857, %s857
            $region496: #{tpu_custom_call.1} parent=492 // loop_header_branch
              %863 = sbr.rel (%p861) target = $region500
            $region497: #{tpu_custom_call.1} parent=492 // loop_body
              %v867 = vld [vmem:[%s865] sm:%s858]
              %868 = vst [vmem:[%s866] sm:%s858] %v867
            $region498: #{tpu_custom_call.1} parent=492 // loop_footer
              %s864 = sadd.s32 1, %s860
            $region499: #{tpu_custom_call.1} parent=492 // loop_footer_branch
              %859 = sbr.rel target = $region495
            $region500: #{tpu_custom_call.1} parent=492 // loop_exit
              _
          $region493: #{tpu_custom_call.1} parent=477 // pred_fallthru
            _
        $region478: #{tpu_custom_call.1} parent=23 // pred_fallthru
          _
        // Predicated region
        $region479: #{tpu_custom_call.1} parent=23 // pred_check
          %p834 = pneg %p830
        $region480: #{tpu_custom_call.1} parent=23 // pred_check_branch
          %836 = sbr.rel (%p834) target = $region482
        $region481: #{tpu_custom_call.1} parent=23 // pred_region
          %s837 = sshllo.u32 0, 1
          loop: start=0, step=1, limit=1
          $region483: #{tpu_custom_call.1} parent=481 // loop_pre_header
            _
          $region484: #{tpu_custom_call.1} parent=481 // loop_header
            %s839 = sphi 0, %s843
            %p840 = scmp.ge.s32.totalorder %s839, 1
            %s844 = sphi %s827, %s827
            %s845 = sphi %s828, %s828
          $region485: #{tpu_custom_call.1} parent=481 // loop_header_branch
            %842 = sbr.rel (%p840) target = $region489
          $region486: #{tpu_custom_call.1} parent=481 // loop_body
            %v846 = vld [vmem:[%s844] sm:%s837]
            %847 = vst [vmem:[%s845] sm:%s837] %v846
          $region487: #{tpu_custom_call.1} parent=481 // loop_footer
            %s843 = sadd.s32 1, %s839
          $region488: #{tpu_custom_call.1} parent=481 // loop_footer_branch
            %838 = sbr.rel target = $region484
          $region489: #{tpu_custom_call.1} parent=481 // loop_exit
            _
        $region482: #{tpu_custom_call.1} parent=23 // pred_fallthru
          _
        // Predicated region
        $region501: #{tpu_custom_call.1} parent=23 // pred_check
          _
        $region502: #{tpu_custom_call.1} parent=23 // pred_check_branch
          %871 = sbr.rel (0) target = $region504
        $region503: #{tpu_custom_call.1} parent=23 // pred_region
          %872 = vsyncadd %s492, 16
        $region504: #{tpu_custom_call.1} parent=23 // pred_fallthru
          _
        %s873 = smul.u32 1, 1
        %s874 = sshll.u32 %s873, 4
        %875 = dma.done [#allocation3], %s874
        %s876 = sshll.u32 %s873, 4
        %877 = dma.done [#allocation3], %s876
        %s878 = sshll.u32 %s873, 4
        %879 = dma.done [#allocation3], %s878
        %s880 = sshll.u32 %s873, 4
        %881 = dma.done [#allocation3], %s880
        %s882 = sshll.u32 %s873, 4
        %883 = dma.done [#allocation3], %s882
        %s884 = sshll.u32 %s873, 4
        %885 = dma.done [#allocation3], %s884
        %s886 = sshll.u32 %s873, 4
        %887 = dma.done [#allocation3], %s886
        %s888 = sshll.u32 %s873, 4
        %889 = dma.done [#allocation3], %s888
        %v890 = vld [vmem:[#allocation2] sm:$0xff]
        %v891 = vpack.c.bf16 %v890, %v890
        %v892 = vld [vmem:[%s2] sm:$0xf]
        %v893 = vld [vmem:[%s2 + $0x4] sm:$0xf]
        %v894 = vld [vmem:[%s2 + $0x8] sm:$0xf]
        %v895 = vld [vmem:[%s2 + $0xc] sm:$0xf]
        %v900 = vunpack.c.l.b16 %v892
        %v901 = vunpack.c.l.b16 %v893
        %v902 = vunpack.c.l.b16 %v894
        %v903 = vunpack.c.l.b16 %v895
        %v904 = vpack.c.b16 %v901, %v900
        %v905 = vpack.c.b16 %v903, %v902
        %vm908 = vcmask 261120
        %v910 = vsel %vm908, %v891, 0
        %912 = vmatprep.subr.bf16.mxu0 0
        %913 = vmatpush1.bf16.msra.mxu0 %v904
        %914 = vmatprep.subr.bf16.mxu0 0
        %915 = vmatpush1.bf16.msra.mxu0 %v905
        %916 = vmatprep.subr.bf16.mxu0 0
        %917 = vmatpush1.bf16.msra.mxu0 0
        %918 = vmatprep.subr.bf16.mxu0 0
        %919 = vmatpush1.bf16.msra.mxu0 0
        %920 = vmatprep.subr.bf16.mxu0 0
        %921 = vmatpush1.bf16.msra.mxu0 0
        %922 = vmatprep.subr.bf16.mxu0 0
        %923 = vmatpush1.bf16.msra.mxu0 0
        %924 = vmatprep.subr.bf16.mxu0 0
        %925 = vmatpush1.bf16.msra.mxu0 0
        %926 = vmatprep.subr.bf16.mxu0 0
        %927 = vmatpush1.bf16.msra.mxu0 0
        %928 = vmatprep.subr.bf16.mxu0 0
        %929 = vmatpush1.bf16.msra.mxu0 0
        %930 = vmatprep.subr.bf16.mxu0 0
        %931 = vmatpush1.bf16.msra.mxu0 0
        %932 = vmatprep.subr.bf16.mxu0 0
        %933 = vmatpush1.bf16.msra.mxu0 0
        %934 = vmatprep.subr.bf16.mxu0 0
        %935 = vmatpush1.bf16.msra.mxu0 0
        %936 = vmatprep.subr.bf16.mxu0 0
        %937 = vmatpush1.bf16.msra.mxu0 0
        %938 = vmatprep.subr.bf16.mxu0 0
        %939 = vmatpush1.bf16.msra.mxu0 0
        %940 = vmatprep.subr.bf16.mxu0 0
        %941 = vmatpush1.bf16.msra.mxu0 0
        %942 = vmatprep.subr.bf16.mxu0 0
        %943 = vmatpush1.bf16.msra.mxu0 0
        %944 = vmatprep.mubr.bf16.mxu0 0
        %945 = vmatmul.mubr.bf16.gmra.mrb[0].mxu0 %v910
        %v946 = vpop.f32.mrb[0].mxu0
        %v947 = vadd.f32 0.0, %v946
        %v948 = vpop.f32.mrb[0].mxu0
        %v949 = vpop.f32.mrb[0].mxu0
        %v950 = vpop.f32.mrb[0].mxu0
        %951 = vdwg.mxu0
        %952 = vst [vmem:[%s102] sm:$0xff] %v947
        %s953 = sshll.u32 %s873, 4
        %954 = dma.done %s492, %s953
        %s955 = sshll.u32 %s873, 4
        %956 = dma.done %s492, %s955
        %s957 = sshll.u32 %s873, 4
        %958 = dma.done %s492, %s957
        %s959 = sshll.u32 %s873, 4
        %960 = dma.done %s492, %s959
        %s961 = sshll.u32 %s873, 4
        %962 = dma.done %s492, %s961
        %s963 = sshll.u32 %s873, 4
        %964 = dma.done %s492, %s963
        %s965 = sshll.u32 %s873, 4
        %966 = dma.done %s492, %s965
        %s967 = sshll.u32 %s873, 4
        %968 = dma.done %s492, %s967
        %v969 = vld [vmem:[#allocation2 + $0x8] sm:$0xff]
        %v970 = vpack.c.bf16 %v969, %v969
        %v971 = vld [vmem:[%s2] sm:$0xf]
        %v972 = vld [vmem:[%s2 + $0x4] sm:$0xf]
        %v973 = vld [vmem:[%s2 + $0x8] sm:$0xf]
        %v974 = vld [vmem:[%s2 + $0xc] sm:$0xf]
        %v979 = vunpack.c.l.b16 %v971
        %v980 = vunpack.c.l.b16 %v972
        %v981 = vunpack.c.l.b16 %v973
        %v982 = vunpack.c.l.b16 %v974
        %v983 = vpack.c.b16 %v980, %v979
        %v984 = vpack.c.b16 %v982, %v981
        %v988 = vsel %vm908, %v970, 0
        %990 = vmatprep.subr.bf16.mxu0 0
        %991 = vmatpush1.bf16.msra.mxu0 %v983
        %992 = vmatprep.subr.bf16.mxu0 0
        %993 = vmatpush1.bf16.msra.mxu0 %v984
        %994 = vmatprep.subr.bf16.mxu0 0
        %995 = vmatpush1.bf16.msra.mxu0 0
        %996 = vmatprep.subr.bf16.mxu0 0
        %997 = vmatpush1.bf16.msra.mxu0 0
        %998 = vmatprep.subr.bf16.mxu0 0
        %999 = vmatpush1.bf16.msra.mxu0 0
        %1000 = vmatprep.subr.bf16.mxu0 0
        %1001 = vmatpush1.bf16.msra.mxu0 0
        %1002 = vmatprep.subr.bf16.mxu0 0
        %1003 = vmatpush1.bf16.msra.mxu0 0
        %1004 = vmatprep.subr.bf16.mxu0 0
        %1005 = vmatpush1.bf16.msra.mxu0 0
        %1006 = vmatprep.subr.bf16.mxu0 0
        %1007 = vmatpush1.bf16.msra.mxu0 0
        %1008 = vmatprep.subr.bf16.mxu0 0
        %1009 = vmatpush1.bf16.msra.mxu0 0
        %1010 = vmatprep.subr.bf16.mxu0 0
        %1011 = vmatpush1.bf16.msra.mxu0 0
        %1012 = vmatprep.subr.bf16.mxu0 0
        %1013 = vmatpush1.bf16.msra.mxu0 0
        %1014 = vmatprep.subr.bf16.mxu0 0
        %1015 = vmatpush1.bf16.msra.mxu0 0
        %1016 = vmatprep.subr.bf16.mxu0 0
        %1017 = vmatpush1.bf16.msra.mxu0 0
        %1018 = vmatprep.subr.bf16.mxu0 0
        %1019 = vmatpush1.bf16.msra.mxu0 0
        %1020 = vmatprep.subr.bf16.mxu0 0
        %1021 = vmatpush1.bf16.msra.mxu0 0
        %1022 = vmatprep.mubr.bf16.mxu0 0
        %1023 = vmatmul.mubr.bf16.gmra.mrb[0].mxu0 %v988
        %v1024 = vpop.f32.mrb[0].mxu0
        %v1025 = vadd.f32 0.0, %v1024
        %v1026 = vpop.f32.mrb[0].mxu0
        %v1027 = vpop.f32.mrb[0].mxu0
        %v1028 = vpop.f32.mrb[0].mxu0
        %1029 = vdwg.mxu0
        %1030 = vst [vmem:[%s102 + $0x8] sm:$0xff] %v1025
        %s1031 = sand.u32 %s52, 1
        %s1032 = scalar_lea.sflag [#allocation7], %s1031
        %s1033 = sand.u32 %s52, 1
        %s1034 = smul.addr %s1033, 16
        %s1035 = scalar_lea.vmem [#allocation6], %s1034
        // Predicated region
        $region505: #{tpu_custom_call.1} parent=23 // pred_check
          %p1036 = pneg %p62
        $region506: #{tpu_custom_call.1} parent=23 // pred_check_branch
          %1038 = sbr.rel (%p1036) target = $region508
        $region507: #{tpu_custom_call.1} parent=23 // pred_region
          %s1039 = smul.u32 2, %s23
          %s1041 = ssub.s32 256, 256
          %1042 = vsyncadd %s1032, %s1041
          %s1043 = smul.addr %s1039, 128
          %s1044 = scalar_lea.hbm %s3, %s1043
          %s1045 = sshll.u32 %s1035, 4
          %s1046 = int_to_ptr.vmem [resolvable:$true] %s1045
          %1051 = dma.vmem_to_hbm [thread:$0]  %s1046, 256, %s1044, %s1032, 128, 128, 8
        $region508: #{tpu_custom_call.1} parent=23 // pred_fallthru
          _
      $region24: #{tpu_custom_call.1} parent=5 // pred_fallthru
        _
      %p1052 = scmp.le.s32.totalorder 2, %s18
      // Predicated region
      $region509: #{tpu_custom_call.1} parent=5 // pred_check
        %p1053 = pneg %p1052
      $region510: #{tpu_custom_call.1} parent=5 // pred_check_branch
        %1055 = sbr.rel (%p1053) target = $region512
      $region511: #{tpu_custom_call.1} parent=5 // pred_region
        %s1056 = ssub.s32 %s18, 2
        // Predicated region
        $region513: #{tpu_custom_call.1} parent=511 // pred_check
          %p1057 = pneg %p68
        $region514: #{tpu_custom_call.1} parent=511 // pred_check_branch
          %1059 = sbr.rel (%p1057) target = $region516
        $region515: #{tpu_custom_call.1} parent=511 // pred_region
          %s1060 = sand.u32 %s53, 1
          %s1061 = scalar_lea.sflag [#allocation7], %s1060
          %s1062 = sand.u32 %s53, 1
          %s1063 = smul.addr %s1062, 16
          %s1064 = scalar_lea.vmem [#allocation6], %s1063
          %1065 = dma.done %s1061, 256
        $region516: #{tpu_custom_call.1} parent=511 // pred_fallthru
          _
      $region512: #{tpu_custom_call.1} parent=5 // pred_fallthru
        _
    $region6: #{tpu_custom_call.1} parent=1 // loop_footer
      %s22 = sadd.s32 1, %s18
    $region7: #{tpu_custom_call.1} parent=1 // loop_footer_branch
      %17 = sbr.rel target = $region3
    $region8: #{tpu_custom_call.1} parent=1 // loop_exit
      _
    %1066 = vsyncpa [#allocation7], 1
    %s1067 = scalar_lea.sflag [#allocation7], 1
    %1068 = vsyncpa %s1067, 1
  %1069 = vsyncmov [#allocation3]
  %s1070 = vpop.sfrf %1069
  %p1071 = scmp.eq.s32.totalorder %s1070, 0
  %p1072 = pneg %p1071
  %1074 = shalt.err (%p1072)
  %s1075 = scalar_lea.sflag [#allocation3], 1
  %1076 = vsyncmov %s1075
  %s1077 = vpop.sfrf %1076
  %p1078 = scmp.eq.s32.totalorder %s1077, 0
  %p1079 = pneg %p1078
  %1081 = shalt.err (%p1079)

</llo_original>
